<compile_context>
chip_gen: v7x
topology: tpu7x:2x2x1
jax: 0.10.0
libtpu: 0.0.40
codegen_flags: <defaults>
</compile_context>

<pallas_src>
import functools

import jax
import jax.numpy as jnp
import numpy as np
from jax import lax
from jax.experimental import pallas as pl
from jax.experimental.pallas import tpu as pltpu

_NEG_BIG = -1e30  # finite "minus infinity" (avoids inf-inf NaNs)


def _supcon_kernel(a_ref, c_ref, rid_ref, cid_ref, loss_ref,
                   m_sc, s_sc, num_sc, cnt_sc,
                   *, temperature, base_temperature,
                   n_valid_rows, n_valid_cols, tm, tn):
    """One (TM anchor rows) x (TN contrast cols) tile of the SupCon loss.

    a_ref:   (TM, Dp)  anchor feature tile (native dtype, fed to MXU)
    c_ref:   (TN, Dp)  contrast feature tile
    rid_ref: (TM, 1)   int32 label-ids of anchor rows (padded rows = -1)
    cid_ref: (1, TN)   int32 label-ids of contrast columns (padded cols = -1)
    loss_ref:(TM, 1)   per-anchor loss (written at the last column block)
    scratch: running max / running sum(exp) / sum(mask*logits) / sum(mask)
    """
    i = pl.program_id(0)                      # anchor (M) block  -- parallel
    j = pl.program_id(1)                      # contrast (N) block -- reduction
    last_j = pl.num_programs(1) - 1

    @pl.when(j == 0)
    def _init():
        m_sc[...] = jnp.full_like(m_sc, _NEG_BIG)
        s_sc[...] = jnp.zeros_like(s_sc)
        num_sc[...] = jnp.zeros_like(num_sc)
        cnt_sc[...] = jnp.zeros_like(cnt_sc)

    # --- logits tile (TM, TN) in f32; NT matmul, no transpose materialized ---
    logits = lax.dot_general(
        a_ref[...], c_ref[...],
        dimension_numbers=(((1,), (1,)), ((), ())),
        preferred_element_type=jnp.float32) * (1.0 / temperature)

    # Stabilizer: max over the *raw* tile (self column / zero-padded columns
    # included).  Any finite upper bound works for the online LSE, so no masked
    # copy of the logits is needed just for the max; masked entries later get
    # exp(_NEG_BIG - m_new) == 0.
    blk_max = jnp.max(logits, axis=1, keepdims=True)
    m_new = jnp.maximum(m_sc[...], blk_max)
    alpha = jnp.exp(m_sc[...] - m_new)

    same_label = rid_ref[...] == cid_ref[...]          # (TM,1)==(1,TN) -> (TM,TN)

    def _accumulate(p, pos_f):
        s_sc[...] = alpha * s_sc[...] + jnp.sum(p, axis=1, keepdims=True)
        # Row-max shift cancels exactly: sum(mask*log_prob) =
        #   sum(mask*logits) - count * logsumexp, so raw logits are enough here.
        num_sc[...] += jnp.sum(pos_f * logits, axis=1, keepdims=True)
        cnt_sc[...] += jnp.sum(pos_f, axis=1, keepdims=True)

    # Only the last column block carries padded columns and only blocks crossed
    # by the global diagonal carry self-contrast entries; every other tile takes
    # the select-free fast path below.
    diag_overlap = jnp.logical_and(i * tm < (j + 1) * tn, j * tn < (i + 1) * tm)
    needs_mask = jnp.logical_or(j == last_j, diag_overlap)

    @pl.when(needs_mask)
    def _masked_tile():
        col_gid = j * tn + lax.broadcasted_iota(jnp.int32, (1, tn), 1)
        row_gid = i * tm + lax.broadcasted_iota(jnp.int32, (tm, 1), 0)
        lmask = jnp.logical_and(col_gid < n_valid_cols, row_gid != col_gid)
        p = jnp.exp(jnp.where(lmask, logits, _NEG_BIG) - m_new)
        pos_f = jnp.logical_and(same_label, lmask).astype(jnp.float32)
        _accumulate(p, pos_f)

    @pl.when(jnp.logical_not(needs_mask))
    def _fast_tile():
        p = jnp.exp(logits - m_new)
        pos_f = same_label.astype(jnp.float32)
        _accumulate(p, pos_f)

    m_sc[...] = m_new

    @pl.when(j == last_j)
    def _finalize():
        lse = m_sc[...] + jnp.log(s_sc[...])
        cnt = cnt_sc[...]
        cnt_safe = jnp.where(cnt < 1e-6, jnp.ones_like(cnt), cnt)
        mean_log_prob_pos = (num_sc[...] - cnt * lse) / cnt_safe
        loss_row = -(temperature / base_temperature) * mean_log_prob_pos
        # Padded anchor rows (including the view-1 rows processed as "anchors"
        # in contrast_mode='one') are zeroed here and excluded from the mean.
        row_valid = (i * tm + lax.broadcasted_iota(jnp.int32, (tm, 1), 0)
                     ) < n_valid_rows
        loss_ref[...] = jnp.where(row_valid, loss_row, 0.0)


def _round_up(x, m):
    return (x + m - 1) // m * m


def _cdiv(a, b):
    return (a + b - 1) // b


def _vmem_capacity_bytes():
    try:
        return int(pltpu.get_tpu_info().vmem_capacity_bytes)
    except Exception:
        return 64 * 1024 * 1024          # conservative: v7x per-TensorCore VMEM


def supcon_loss(features, labels=None, mask=None, *, temperature=0.07,
                contrast_mode="all", base_temperature=0.07,
                compute_dtype=None, max_tn=None):
    """JAX/Pallas equivalent of SupConLoss.forward.

    features: [bsz, n_views, ...] float array.
    labels:   optional [bsz] int array (same-label samples are positives).
    mask:     optional [bsz, bsz] float array (rare path; see TODO below).
    compute_dtype: dtype fed to the MXU (default: features.dtype).
        Passing jnp.bfloat16 for f32 features halves the dominant HBM stream
        and uses the native bf16 MXU path (recommended for training losses).
    max_tn: optional cap on the contrast tile width (tuning / testing knob).
    Returns a scalar float32 loss.
    """
    if features.ndim < 3:
        raise ValueError("`features` needs to be [bsz, n_views, ...]")
    if features.ndim > 3:
        features = features.reshape(features.shape[0], features.shape[1], -1)
    bsz, n_views, dim = features.shape

    if labels is not None and mask is not None:
        raise ValueError("Cannot define both `labels` and `mask`")

    if mask is not None:
        # TODO(synk): explicit [bsz, bsz] `mask` argument (arbitrary/asymmetric
        # positives) is a rare path and falls back to the pure-JAX reference;
        # the labels / unsupervised paths below run fully in Pallas.
        return supcon_loss_ref(features, mask=mask, temperature=temperature,
                               contrast_mode=contrast_mode,
                               base_temperature=base_temperature)

    if labels is None:
        ids = jnp.arange(bsz, dtype=jnp.int32)            # SimCLR: eye(bsz)
    else:
        labels = jnp.asarray(labels).reshape(-1)
        if labels.shape[0] != bsz:
            raise ValueError("Num of labels does not match num of features")
        ids = labels.astype(jnp.int32)

    contrast_count = n_views
    # torch.cat(torch.unbind(features, dim=1), dim=0) -> [n_views*bsz, dim]
    contrast_feature = jnp.transpose(features, (1, 0, 2)).reshape(
        n_views * bsz, dim)
    if contrast_mode == "one":
        anchor_count = 1            # anchors == first bsz rows (view 0)
    elif contrast_mode == "all":
        anchor_count = contrast_count
    else:
        raise ValueError(f"Unknown mode: {contrast_mode}")

    M = anchor_count * bsz          # number of anchors
    N = contrast_count * bsz        # number of contrast columns

    dt = jnp.dtype(compute_dtype) if compute_dtype is not None \
        else features.dtype
    isz = jnp.dtype(dt).itemsize

    # ---- tile selection (VMEM-budget driven, generation aware) -------------
    D_pad = _round_up(dim, 128)
    # TM=128 keeps >=2 parallel M blocks for v7x megacore at small/medium M and
    # is MXU-dense on v5e; bump to 256 only for large M.
    TM = 256 if M > 512 else 128
    M_pad = _round_up(M, TM)
    Np128 = _round_up(N, 128)

    cap = _vmem_capacity_bytes()
    budget = max(24 << 20, int(cap * 0.55))   # ~35 MiB on v7x, ~70 MiB on v5e/v6e

    def _vmem_est(tn):
        return (2 * TM * D_pad * isz          # double-buffered anchor tiles
                + 2 * tn * D_pad * isz        # contrast tile buffers
                + 6 * TM * tn * 4             # live (TM, TN) f32 temporaries
                + 2 * (TM + tn) * 4 + 16 * TM * 4)   # ids, scratch, output

    # Resident-contrast path: when the whole (padded) contrast matrix fits the
    # budget, use a single column block — its block index is constant over the
    # grid, so Pallas fetches it from HBM exactly once (no per-anchor-block
    # re-streaming).
    if (max_tn is None or Np128 <= max_tn) and _vmem_est(Np128) <= budget:
        TN = Np128
    else:
        tn_cap = 2048 if max_tn is None else max(128, _round_up(max_tn, 128))
        while tn_cap > 128 and _vmem_est(tn_cap) > budget:
            tn_cap //= 2
        # TODO(synk): if the feature tiles alone blow the budget (very large
        # feature dims on v7x), add a K (feature-dim) reduction grid axis
        # instead of shrinking TN further.
        nb = _cdiv(Np128 // 128, max(tn_cap // 128, 1))
        TN = 128 * _cdiv(Np128 // 128, nb)    # minimal N padding under the cap
    N_pad = TN * _cdiv(Np128, TN)
    R_pad = max(M_pad, N_pad)       # feature rows cover both anchor & contrast

    # Single feature array reused for anchor and contrast tiles (anchors are
    # always the first M rows of contrast_feature, in both modes).
    feats = jnp.pad(contrast_feature.astype(dt),
                    ((0, R_pad - N), (0, D_pad - dim)))
    col_ids = jnp.pad(jnp.tile(ids, contrast_count), (0, N_pad - N),
                      constant_values=-1).reshape(1, N_pad)
    row_ids = jnp.pad(jnp.tile(ids, anchor_count), (0, M_pad - M),
                      constant_values=-1).reshape(M_pad, 1)

    kernel = functools.partial(
        _supcon_kernel, temperature=float(temperature),
        base_temperature=float(base_temperature),
        n_valid_rows=M, n_valid_cols=N, tm=TM, tn=TN)

    vmem_limit = int(min(max(32 << 20, _vmem_est(TN) + (8 << 20)),
                         cap - (8 << 20)))
    vmem_limit = max(vmem_limit, 16 << 20)

    grid = (M_pad // TM, N_pad // TN)
    per_anchor = pl.pallas_call(
        kernel,
        out_shape=jax.ShapeDtypeStruct((M_pad, 1), jnp.float32),
        grid_spec=pltpu.PrefetchScalarGridSpec(
            num_scalar_prefetch=0,
            grid=grid,
            in_specs=[
                pl.BlockSpec((TM, D_pad), lambda i, j: (i, 0)),  # anchor tile
                pl.BlockSpec((TN, D_pad), lambda i, j: (j, 0)),  # contrast tile
                pl.BlockSpec((TM, 1), lambda i, j: (i, 0)),      # row ids
                pl.BlockSpec((1, TN), lambda i, j: (0, j)),      # col ids
            ],
            out_specs=pl.BlockSpec((TM, 1), lambda i, j: (i, 0)),
            scratch_shapes=[pltpu.VMEM((TM, 1), jnp.float32)] * 4,
        ),
        compiler_params=pltpu.CompilerParams(
            dimension_semantics=("parallel", "arbitrary"),
            vmem_limit_bytes=vmem_limit),
    )(feats, feats, row_ids, col_ids)

    # loss.view(anchor_count, batch_size).mean() == sum over anchors / M.
    # Padded anchor rows were zeroed inside the kernel.
    return jnp.sum(per_anchor) / (anchor_count * bsz)


def supcon_loss_ref(features, labels=None, mask=None, *, temperature=0.07,
                    contrast_mode="all", base_temperature=0.07):
    """Pure-JAX reference (direct port of the PyTorch code)."""
    if features.ndim > 3:
        features = features.reshape(features.shape[0], features.shape[1], -1)
    bsz, n_views, dim = features.shape
    if labels is not None and mask is not None:
        raise ValueError("Cannot define both `labels` and `mask`")
    if labels is None and mask is None:
        mask = jnp.eye(bsz, dtype=jnp.float32)
    elif labels is not None:
        labels = jnp.asarray(labels).reshape(-1, 1)
        mask = (labels == labels.T).astype(jnp.float32)
    else:
        mask = mask.astype(jnp.float32)

    contrast_count = n_views
    contrast_feature = jnp.transpose(features, (1, 0, 2)).reshape(
        n_views * bsz, dim)
    if contrast_mode == "one":
        anchor_feature = features[:, 0]
        anchor_count = 1
    elif contrast_mode == "all":
        anchor_feature = contrast_feature
        anchor_count = contrast_count
    else:
        raise ValueError(f"Unknown mode: {contrast_mode}")

    adc = jnp.dot(anchor_feature, contrast_feature.T,
                  precision=jax.lax.Precision.HIGHEST) / temperature
    logits = adc - jnp.max(adc, axis=1, keepdims=True)
    mask = jnp.tile(mask, (anchor_count, contrast_count))
    M = anchor_count * bsz
    logits_mask = jnp.ones_like(mask).at[jnp.arange(M), jnp.arange(M)].set(0.0)
    mask = mask * logits_mask
    exp_logits = jnp.exp(logits) * logits_mask
    log_prob = logits - jnp.log(jnp.sum(exp_logits, axis=1, keepdims=True))
    mpp = jnp.sum(mask, axis=1)
    mpp = jnp.where(mpp < 1e-6, 1.0, mpp)
    mean_log_prob_pos = jnp.sum(mask * log_prob, axis=1) / mpp
    loss = -(temperature / base_temperature) * mean_log_prob_pos
    return loss.reshape(anchor_count, bsz).mean()


if __name__ == "__main__":
    key = jax.random.PRNGKey(0)
    bsz, n_views, dim = 8, 2, 32
    k1, k2, k3, k4 = jax.random.split(key, 4)
    features = jax.random.normal(k1, (bsz, n_views, dim), dtype=jnp.float32)
    # L2-normalize features (typical SupCon usage; semantics unchanged)
    features = features / jnp.linalg.norm(features, axis=-1, keepdims=True)
    labels = jax.random.randint(k2, (bsz,), 0, 3)

    # f32 path (matches the PyTorch reference numerics)
    loss_sup = jax.block_until_ready(supcon_loss(features, labels=labels))
    loss_simclr = jax.block_until_ready(supcon_loss(features))
    loss_one = jax.block_until_ready(
        supcon_loss(features, labels=labels, contrast_mode="one"))

    ref_sup = supcon_loss_ref(features, labels=labels)
    ref_simclr = supcon_loss_ref(features)
    ref_one = supcon_loss_ref(features, labels=labels, contrast_mode="one")

    np.testing.assert_allclose(np.asarray(loss_sup), np.asarray(ref_sup),
                               rtol=1e-3, atol=1e-3)
    np.testing.assert_allclose(np.asarray(loss_simclr), np.asarray(ref_simclr),
                               rtol=1e-3, atol=1e-3)
    np.testing.assert_allclose(np.asarray(loss_one), np.asarray(ref_one),
                               rtol=1e-3, atol=1e-3)

    # Multi-tile path: streamed contrast (max_tn=128) exercises the interior
    # select-free fast path, the diagonal masked tiles and the online LSE.
    bsz2, n_views2, dim2 = 96, 2, 40
    feats2 = jax.random.normal(k3, (bsz2, n_views2, dim2), dtype=jnp.float32)
    feats2 = feats2 / jnp.linalg.norm(feats2, axis=-1, keepdims=True)
    labels2 = jax.random.randint(k4, (bsz2,), 0, 10)
    loss2 = jax.block_until_ready(
        supcon_loss(feats2, labels=labels2, max_tn=128))
    ref2 = supcon_loss_ref(feats2, labels=labels2)
    np.testing.assert_allclose(np.asarray(loss2), np.asarray(ref2),
                               rtol=1e-3, atol=1e-3)

    # bf16 feature path (halves feature HBM/DMA bytes; looser tolerance)
    loss_bf16 = jax.block_until_ready(
        supcon_loss(features, labels=labels, compute_dtype=jnp.bfloat16))
    np.testing.assert_allclose(np.asarray(loss_bf16), np.asarray(ref_sup),
                               rtol=3e-2, atol=3e-2)

    print("KERNEL_OK")
</pallas_src>

<mosaic_0001>
module attributes {stable_mosaic.version = 11 : i64} {
  func.func @_supcon_kernel(%arg0: i32, %arg1: i32, %arg2: memref<128x128xf32, #tpu.memory_space<vmem>>, %arg3: memref<128x128xf32, #tpu.memory_space<vmem>>, %arg4: memref<128x1xi32, #tpu.memory_space<vmem>>, %arg5: memref<1x128xi32, #tpu.memory_space<vmem>>, %arg6: memref<128x1xf32, #tpu.memory_space<vmem>>, %arg7: memref<128x1xf32, #tpu.memory_space<vmem>>, %arg8: memref<128x1xf32, #tpu.memory_space<vmem>>, %arg9: memref<128x1xf32, #tpu.memory_space<vmem>>, %arg10: memref<128x1xf32, #tpu.memory_space<vmem>>) attributes {dimension_semantics = [#tpu.dimension_semantics<parallel>, #tpu.dimension_semantics<arbitrary>], iteration_bounds = array<i64: 1, 1>, scalar_prefetch = 0 : i64, scratch_operands = 4 : i64, tpu.core_type = #tpu.core_type<tc>, window_params = [{transform_indices = @transform_0, window_bounds = array<i64: 128, 128>}, {transform_indices = @transform_1, window_bounds = array<i64: 128, 128>}, {transform_indices = @transform_2, window_bounds = array<i64: 128, 1>}, {transform_indices = @transform_3, window_bounds = array<i64: 1, 128>}, {transform_indices = @transform_4, window_bounds = array<i64: 128, 1>}]} {
    %c0_i32 = arith.constant 0 : i32
    %0 = arith.cmpi eq, %arg1, %c0_i32 : i32
    %1 = arith.extui %0 : i1 to i32
    %c0_i32_0 = arith.constant 0 : i32
    %2 = arith.cmpi ne, %1, %c0_i32_0 : i32
    scf.if %2 {
      %cst_25 = arith.constant -1.000000e+30 : f32
      %40 = vector.broadcast %cst_25 : f32 to vector<128x1xf32>
      %c0_26 = arith.constant 0 : index
      %c0_27 = arith.constant 0 : index
      %41 = vector.load %arg7[%c0_26, %c0_27] : memref<128x1xf32, #tpu.memory_space<vmem>>, vector<128x1xf32>
      tpu.vector_store %arg7[%c0_26, %c0_27], %40 {strides = array<i32>} : memref<128x1xf32, #tpu.memory_space<vmem>>, vector<128x1xf32>,
      %cst_28 = arith.constant 0.000000e+00 : f32
      %42 = vector.broadcast %cst_28 : f32 to vector<128x1xf32>
      %c0_29 = arith.constant 0 : index
      %c0_30 = arith.constant 0 : index
      %43 = vector.load %arg8[%c0_29, %c0_30] : memref<128x1xf32, #tpu.memory_space<vmem>>, vector<128x1xf32>
      tpu.vector_store %arg8[%c0_29, %c0_30], %42 {strides = array<i32>} : memref<128x1xf32, #tpu.memory_space<vmem>>, vector<128x1xf32>,
      %cst_31 = arith.constant 0.000000e+00 : f32
      %44 = vector.broadcast %cst_31 : f32 to vector<128x1xf32>
      %c0_32 = arith.constant 0 : index
      %c0_33 = arith.constant 0 : index
      %45 = vector.load %arg9[%c0_32, %c0_33] : memref<128x1xf32, #tpu.memory_space<vmem>>, vector<128x1xf32>
      tpu.vector_store %arg9[%c0_32, %c0_33], %44 {strides = array<i32>} : memref<128x1xf32, #tpu.memory_space<vmem>>, vector<128x1xf32>,
      %cst_34 = arith.constant 0.000000e+00 : f32
      %46 = vector.broadcast %cst_34 : f32 to vector<128x1xf32>
      %c0_35 = arith.constant 0 : index
      %c0_36 = arith.constant 0 : index
      %47 = vector.load %arg10[%c0_35, %c0_36] : memref<128x1xf32, #tpu.memory_space<vmem>>, vector<128x1xf32>
      tpu.vector_store %arg10[%c0_35, %c0_36], %46 {strides = array<i32>} : memref<128x1xf32, #tpu.memory_space<vmem>>, vector<128x1xf32>,
    } else {
    }
    %c0 = arith.constant 0 : index
    %c0_1 = arith.constant 0 : index
    %3 = vector.load %arg2[%c0, %c0_1] : memref<128x128xf32, #tpu.memory_space<vmem>>, vector<128x128xf32>
    %c0_2 = arith.constant 0 : index
    %c0_3 = arith.constant 0 : index
    %4 = vector.load %arg3[%c0_2, %c0_3] : memref<128x128xf32, #tpu.memory_space<vmem>>, vector<128x128xf32>
    %cst = arith.constant dense<0.000000e+00> : vector<128x128xf32>
    %5 = tpu.matmul %3, %4, %cst {dimension_numbers = #tpu.dot_dimension_numbers<[1], [1], [0], [0], [0, 0, 1, 0], [], []>} : vector<128x128xf32>, vector<128x128xf32>, vector<128x128xf32> -> vector<128x128xf32>
    %cst_4 = arith.constant 14.2857141 : f32
    %6 = vector.broadcast %cst_4 : f32 to vector<128x128xf32>
    %7 = arith.mulf %5, %6 : vector<128x128xf32>
    %cst_5 = arith.constant dense<0xFF800000> : vector<128xf32>
    %8 = vector.multi_reduction <maximumf>, %7, %cst_5 [1] : vector<128x128xf32> to vector<128xf32>
    %9 = vector.shape_cast %8 : vector<128xf32> to vector<128x1xf32>
    %c0_6 = arith.constant 0 : index
    %c0_7 = arith.constant 0 : index
    %10 = vector.load %arg7[%c0_6, %c0_7] : memref<128x1xf32, #tpu.memory_space<vmem>>, vector<128x1xf32>
    %11 = arith.maximumf %10, %9 : vector<128x1xf32>
    %c0_8 = arith.constant 0 : index
    %c0_9 = arith.constant 0 : index
    %12 = vector.load %arg7[%c0_8, %c0_9] : memref<128x1xf32, #tpu.memory_space<vmem>>, vector<128x1xf32>
    %13 = arith.subf %12, %11 : vector<128x1xf32>
    %14 = math.exp %13 : vector<128x1xf32>
    %c0_10 = arith.constant 0 : index
    %c0_11 = arith.constant 0 : index
    %15 = vector.load %arg4[%c0_10, %c0_11] : memref<128x1xi32, #tpu.memory_space<vmem>>, vector<128x1xi32>
    %c0_12 = arith.constant 0 : index
    %c0_13 = arith.constant 0 : index
    %16 = vector.load %arg5[%c0_12, %c0_13] : memref<1x128xi32, #tpu.memory_space<vmem>>, vector<1x128xi32>
    %17 = vector.broadcast %15 : vector<128x1xi32> to vector<128x128xi32>
    %18 = vector.broadcast %16 : vector<1x128xi32> to vector<128x128xi32>
    %19 = arith.cmpi eq, %17, %18 : vector<128x128xi32>
    %c128_i32 = arith.constant 128 : i32
    %20 = arith.muli %arg0, %c128_i32 : i32
    %c1_i32 = arith.constant 1 : i32
    %21 = arith.addi %arg1, %c1_i32 : i32
    %c128_i32_14 = arith.constant 128 : i32
    %22 = arith.muli %21, %c128_i32_14 : i32
    %23 = arith.cmpi slt, %20, %22 : i32
    %c128_i32_15 = arith.constant 128 : i32
    %24 = arith.muli %arg1, %c128_i32_15 : i32
    %c1_i32_16 = arith.constant 1 : i32
    %25 = arith.addi %arg0, %c1_i32_16 : i32
    %c128_i32_17 = arith.constant 128 : i32
    %26 = arith.muli %25, %c128_i32_17 : i32
    %27 = arith.cmpi slt, %24, %26 : i32
    %28 = arith.andi %23, %27 : i1
    %c0_i32_18 = arith.constant 0 : i32
    %29 = arith.cmpi eq, %arg1, %c0_i32_18 : i32
    %30 = arith.ori %29, %28 : i1
    %31 = arith.extui %30 : i1 to i32
    %c0_i32_19 = arith.constant 0 : i32
    %32 = arith.cmpi ne, %31, %c0_i32_19 : i32
    scf.if %32 {
      %c128_i32_25 = arith.constant 128 : i32
      %40 = arith.muli %arg1, %c128_i32_25 : i32
      %41 = tpu.iota {dimensions = array<i32: 1>} : vector<1x128xi32>
      %42 = vector.broadcast %40 : i32 to vector<1x128xi32>
      %43 = arith.addi %42, %41 : vector<1x128xi32>
      %c128_i32_26 = arith.constant 128 : i32
      %44 = arith.muli %arg0, %c128_i32_26 : i32
      %45 = tpu.iota {dimensions = array<i32: 0>} : vector<128x1xi32>
      %46 = vector.broadcast %44 : i32 to vector<128x1xi32>
      %47 = arith.addi %46, %45 : vector<128x1xi32>
      %c16_i32 = arith.constant 16 : i32
      %48 = vector.broadcast %c16_i32 : i32 to vector<1x128xi32>
      %49 = arith.cmpi slt, %43, %48 : vector<1x128xi32>
      %50 = vector.broadcast %47 : vector<128x1xi32> to vector<128x128xi32>
      %51 = vector.broadcast %43 : vector<1x128xi32> to vector<128x128xi32>
      %52 = arith.cmpi ne, %50, %51 : vector<128x128xi32>
      %53 = vector.broadcast %49 : vector<1x128xi1> to vector<128x128xi1>
      %54 = arith.andi %53, %52 : vector<128x128xi1>
      %cst_27 = arith.constant -1.000000e+30 : f32
      %55 = vector.broadcast %cst_27 : f32 to vector<128x128xf32>
      %56 = arith.select %54, %7, %55 : vector<128x128xi1>, vector<128x128xf32>
      %57 = vector.broadcast %11 : vector<128x1xf32> to vector<128x128xf32>
      %58 = arith.subf %56, %57 : vector<128x128xf32>
      %59 = math.exp %58 : vector<128x128xf32>
      %60 = arith.andi %19, %54 : vector<128x128xi1>
      %61 = arith.extui %60 : vector<128x128xi1> to vector<128x128xi32>
      %62 = arith.sitofp %61 : vector<128x128xi32> to vector<128x128xf32>
      %c0_28 = arith.constant 0 : index
      %c0_29 = arith.constant 0 : index
      %63 = vector.load %arg8[%c0_28, %c0_29] : memref<128x1xf32, #tpu.memory_space<vmem>>, vector<128x1xf32>
      %64 = arith.mulf %14, %63 : vector<128x1xf32>
      %cst_30 = arith.constant dense<0.000000e+00> : vector<128xf32>
      %65 = vector.multi_reduction <add>, %59, %cst_30 [1] : vector<128x128xf32> to vector<128xf32>
      %66 = vector.shape_cast %65 : vector<128xf32> to vector<128x1xf32>
      %67 = arith.addf %64, %66 : vector<128x1xf32>
      %c0_31 = arith.constant 0 : index
      %c0_32 = arith.constant 0 : index
      %68 = vector.load %arg8[%c0_31, %c0_32] : memref<128x1xf32, #tpu.memory_space<vmem>>, vector<128x1xf32>
      tpu.vector_store %arg8[%c0_31, %c0_32], %67 {strides = array<i32>} : memref<128x1xf32, #tpu.memory_space<vmem>>, vector<128x1xf32>,
      %c0_33 = arith.constant 0 : index
      %c0_34 = arith.constant 0 : index
      %69 = vector.load %arg9[%c0_33, %c0_34] : memref<128x1xf32, #tpu.memory_space<vmem>>, vector<128x1xf32>
      %70 = arith.mulf %62, %7 : vector<128x128xf32>
      %cst_35 = arith.constant dense<0.000000e+00> : vector<128xf32>
      %71 = vector.multi_reduction <add>, %70, %cst_35 [1] : vector<128x128xf32> to vector<128xf32>
      %72 = vector.shape_cast %71 : vector<128xf32> to vector<128x1xf32>
      %73 = arith.addf %69, %72 : vector<128x1xf32>
      %c0_36 = arith.constant 0 : index
      %c0_37 = arith.constant 0 : index
      %74 = vector.load %arg9[%c0_36, %c0_37] : memref<128x1xf32, #tpu.memory_space<vmem>>, vector<128x1xf32>
      tpu.vector_store %arg9[%c0_36, %c0_37], %73 {strides = array<i32>} : memref<128x1xf32, #tpu.memory_space<vmem>>, vector<128x1xf32>,
      %c0_38 = arith.constant 0 : index
      %c0_39 = arith.constant 0 : index
      %75 = vector.load %arg10[%c0_38, %c0_39] : memref<128x1xf32, #tpu.memory_space<vmem>>, vector<128x1xf32>
      %cst_40 = arith.constant dense<0.000000e+00> : vector<128xf32>
      %76 = vector.multi_reduction <add>, %62, %cst_40 [1] : vector<128x128xf32> to vector<128xf32>
      %77 = vector.shape_cast %76 : vector<128xf32> to vector<128x1xf32>
      %78 = arith.addf %75, %77 : vector<128x1xf32>
      %c0_41 = arith.constant 0 : index
      %c0_42 = arith.constant 0 : index
      %79 = vector.load %arg10[%c0_41, %c0_42] : memref<128x1xf32, #tpu.memory_space<vmem>>, vector<128x1xf32>
      tpu.vector_store %arg10[%c0_41, %c0_42], %78 {strides = array<i32>} : memref<128x1xf32, #tpu.memory_space<vmem>>, vector<128x1xf32>,
    } else {
    }
    %true = arith.constant true
    %33 = arith.xori %30, %true : i1
    %34 = arith.extui %33 : i1 to i32
    %c0_i32_20 = arith.constant 0 : i32
    %35 = arith.cmpi ne, %34, %c0_i32_20 : i32
    scf.if %35 {
      %40 = vector.broadcast %11 : vector<128x1xf32> to vector<128x128xf32>
      %41 = arith.subf %7, %40 : vector<128x128xf32>
      %42 = math.exp %41 : vector<128x128xf32>
      %43 = arith.extui %19 : vector<128x128xi1> to vector<128x128xi32>
      %44 = arith.sitofp %43 : vector<128x128xi32> to vector<128x128xf32>
      %c0_25 = arith.constant 0 : index
      %c0_26 = arith.constant 0 : index
      %45 = vector.load %arg8[%c0_25, %c0_26] : memref<128x1xf32, #tpu.memory_space<vmem>>, vector<128x1xf32>
      %46 = arith.mulf %14, %45 : vector<128x1xf32>
      %cst_27 = arith.constant dense<0.000000e+00> : vector<128xf32>
      %47 = vector.multi_reduction <add>, %42, %cst_27 [1] : vector<128x128xf32> to vector<128xf32>
      %48 = vector.shape_cast %47 : vector<128xf32> to vector<128x1xf32>
      %49 = arith.addf %46, %48 : vector<128x1xf32>
      %c0_28 = arith.constant 0 : index
      %c0_29 = arith.constant 0 : index
      %50 = vector.load %arg8[%c0_28, %c0_29] : memref<128x1xf32, #tpu.memory_space<vmem>>, vector<128x1xf32>
      tpu.vector_store %arg8[%c0_28, %c0_29], %49 {strides = array<i32>} : memref<128x1xf32, #tpu.memory_space<vmem>>, vector<128x1xf32>,
      %c0_30 = arith.constant 0 : index
      %c0_31 = arith.constant 0 : index
      %51 = vector.load %arg9[%c0_30, %c0_31] : memref<128x1xf32, #tpu.memory_space<vmem>>, vector<128x1xf32>
      %52 = arith.mulf %44, %7 : vector<128x128xf32>
      %cst_32 = arith.constant dense<0.000000e+00> : vector<128xf32>
      %53 = vector.multi_reduction <add>, %52, %cst_32 [1] : vector<128x128xf32> to vector<128xf32>
      %54 = vector.shape_cast %53 : vector<128xf32> to vector<128x1xf32>
      %55 = arith.addf %51, %54 : vector<128x1xf32>
      %c0_33 = arith.constant 0 : index
      %c0_34 = arith.constant 0 : index
      %56 = vector.load %arg9[%c0_33, %c0_34] : memref<128x1xf32, #tpu.memory_space<vmem>>, vector<128x1xf32>
      tpu.vector_store %arg9[%c0_33, %c0_34], %55 {strides = array<i32>} : memref<128x1xf32, #tpu.memory_space<vmem>>, vector<128x1xf32>,
      %c0_35 = arith.constant 0 : index
      %c0_36 = arith.constant 0 : index
      %57 = vector.load %arg10[%c0_35, %c0_36] : memref<128x1xf32, #tpu.memory_space<vmem>>, vector<128x1xf32>
      %cst_37 = arith.constant dense<0.000000e+00> : vector<128xf32>
      %58 = vector.multi_reduction <add>, %44, %cst_37 [1] : vector<128x128xf32> to vector<128xf32>
      %59 = vector.shape_cast %58 : vector<128xf32> to vector<128x1xf32>
      %60 = arith.addf %57, %59 : vector<128x1xf32>
      %c0_38 = arith.constant 0 : index
      %c0_39 = arith.constant 0 : index
      %61 = vector.load %arg10[%c0_38, %c0_39] : memref<128x1xf32, #tpu.memory_space<vmem>>, vector<128x1xf32>
      tpu.vector_store %arg10[%c0_38, %c0_39], %60 {strides = array<i32>} : memref<128x1xf32, #tpu.memory_space<vmem>>, vector<128x1xf32>,
    } else {
    }
    %c0_21 = arith.constant 0 : index
    %c0_22 = arith.constant 0 : index
    %36 = vector.load %arg7[%c0_21, %c0_22] : memref<128x1xf32, #tpu.memory_space<vmem>>, vector<128x1xf32>
    tpu.vector_store %arg7[%c0_21, %c0_22], %11 {strides = array<i32>} : memref<128x1xf32, #tpu.memory_space<vmem>>, vector<128x1xf32>,
    %c0_i32_23 = arith.constant 0 : i32
    %37 = arith.cmpi eq, %arg1, %c0_i32_23 : i32
    %38 = arith.extui %37 : i1 to i32
    %c0_i32_24 = arith.constant 0 : i32
    %39 = arith.cmpi ne, %38, %c0_i32_24 : i32
    scf.if %39 {
      %c0_25 = arith.constant 0 : index
      %c0_26 = arith.constant 0 : index
      %40 = vector.load %arg7[%c0_25, %c0_26] : memref<128x1xf32, #tpu.memory_space<vmem>>, vector<128x1xf32>
      %c0_27 = arith.constant 0 : index
      %c0_28 = arith.constant 0 : index
      %41 = vector.load %arg8[%c0_27, %c0_28] : memref<128x1xf32, #tpu.memory_space<vmem>>, vector<128x1xf32>
      %42 = math.log %41 : vector<128x1xf32>
      %43 = arith.addf %40, %42 : vector<128x1xf32>
      %c0_29 = arith.constant 0 : index
      %c0_30 = arith.constant 0 : index
      %44 = vector.load %arg10[%c0_29, %c0_30] : memref<128x1xf32, #tpu.memory_space<vmem>>, vector<128x1xf32>
      %cst_31 = arith.constant 9.99999997E-7 : f32
      %45 = vector.broadcast %cst_31 : f32 to vector<128x1xf32>
      %46 = arith.cmpf olt, %44, %45 : vector<128x1xf32>
      %cst_32 = arith.constant 1.000000e+00 : f32
      %47 = vector.broadcast %cst_32 : f32 to vector<128x1xf32>
      %48 = arith.select %46, %47, %44 : vector<128x1xi1>, vector<128x1xf32>
      %c0_33 = arith.constant 0 : index
      %c0_34 = arith.constant 0 : index
      %49 = vector.load %arg9[%c0_33, %c0_34] : memref<128x1xf32, #tpu.memory_space<vmem>>, vector<128x1xf32>
      %50 = arith.mulf %44, %43 : vector<128x1xf32>
      %51 = arith.subf %49, %50 : vector<128x1xf32>
      %52 = arith.divf %51, %48 : vector<128x1xf32>
      %cst_35 = arith.constant -1.000000e+00 : f32
      %53 = vector.broadcast %cst_35 : f32 to vector<128x1xf32>
      %54 = arith.mulf %53, %52 : vector<128x1xf32>
      %c128_i32_36 = arith.constant 128 : i32
      %55 = arith.muli %arg0, %c128_i32_36 : i32
      %56 = tpu.iota {dimensions = array<i32: 0>} : vector<128x1xi32>
      %57 = vector.broadcast %55 : i32 to vector<128x1xi32>
      %58 = arith.addi %57, %56 : vector<128x1xi32>
      %c16_i32 = arith.constant 16 : i32
      %59 = vector.broadcast %c16_i32 : i32 to vector<128x1xi32>
      %60 = arith.cmpi slt, %58, %59 : vector<128x1xi32>
      %cst_37 = arith.constant 0.000000e+00 : f32
      %61 = vector.broadcast %cst_37 : f32 to vector<128x1xf32>
      %62 = arith.select %60, %54, %61 : vector<128x1xi1>, vector<128x1xf32>
      %c0_38 = arith.constant 0 : index
      %c0_39 = arith.constant 0 : index
      %63 = vector.load %arg6[%c0_38, %c0_39] : memref<128x1xf32, #tpu.memory_space<vmem>>, vector<128x1xf32>
      tpu.vector_store %arg6[%c0_38, %c0_39], %62 {strides = array<i32>} : memref<128x1xf32, #tpu.memory_space<vmem>>, vector<128x1xf32>,
    } else {
    }
    return
  }
  func.func @transform_0(%arg0: i32, %arg1: i32) -> (i32, i32) {
    %c0_i32 = arith.constant 0 : i32
    %c0_i32_0 = arith.constant 0 : i32
    return %arg0, %c0_i32 : i32, i32
  }
  func.func @transform_1(%arg0: i32, %arg1: i32) -> (i32, i32) {
    %c0_i32 = arith.constant 0 : i32
    %c0_i32_0 = arith.constant 0 : i32
    return %arg1, %c0_i32 : i32, i32
  }
  func.func @transform_2(%arg0: i32, %arg1: i32) -> (i32, i32) {
    %c0_i32 = arith.constant 0 : i32
    %c0_i32_0 = arith.constant 0 : i32
    return %arg0, %c0_i32 : i32, i32
  }
  func.func @transform_3(%arg0: i32, %arg1: i32) -> (i32, i32) {
    %c0_i32 = arith.constant 0 : i32
    %c0_i32_0 = arith.constant 0 : i32
    return %c0_i32, %arg1 : i32, i32
  }
  func.func @transform_4(%arg0: i32, %arg1: i32) -> (i32, i32) {
    %c0_i32 = arith.constant 0 : i32
    %c0_i32_0 = arith.constant 0 : i32
    return %arg0, %c0_i32 : i32, i32
  }
}

</mosaic_0001>

<llo_original>
// kernel: tpu_custom_call.1
$region0: #{tpu_custom_call.1}
  #allocation0 [shape = 'u32[]', space=smem, size = 0x4, offset = 0x4, fixed_abs, tag = 'smem constant byte address 0x4 - core index']
  #allocation1 [shape = 'u32[144,128]{1,0:T(1,128)}', space=vmem, size = 0x12000, scoped, tag = 'internal scratch']
  #allocation2 [shape = 'f32[128,1]{1,0:T(8,128)}', space=vmem, size = 0x10000, scoped, tag = 'scratch operand']
  #allocation3 [shape = 'f32[128,1]{1,0:T(8,128)}', space=vmem, size = 0x10000, scoped, tag = 'scratch operand']
  #allocation4 [shape = 'f32[128,1]{1,0:T(8,128)}', space=vmem, size = 0x10000, scoped, tag = 'scratch operand']
  #allocation5 [shape = 'f32[128,1]{1,0:T(8,128)}', space=vmem, size = 0x10000, scoped, tag = 'scratch operand']
  %s0 = inlined_call_operand.vmem [shape: f32[128,128], index: 0, kind: input, shape index: {}]
  %s1 = inlined_call_operand.hbm [shape: f32[128,128], index: 1, kind: input, shape index: {}]
  %s2 = inlined_call_operand.vmem [shape: s32[128,1], index: 2, kind: input, shape index: {}]
  %s3 = inlined_call_operand.vmem [shape: s32[1,128], index: 3, kind: input, shape index: {}]
  %s4 = inlined_call_operand.vmem [shape: f32[128,1], index: 4, kind: output, shape index: {}]
  %s5 = sld [smem:[#allocation0]]
  $region46: #{tpu_custom_call.1} parent=0
    _
  %s7 = ssub.s32 1, %s5
  %s8 = scalar_select 0, %s7, %s5
  $region1: #{tpu_custom_call.1} parent=0
    #allocation6 [shape = 'u8[65536]{0}', space=vmem, size = 0x10000, scoped, tag = 'input window, operand 1, single buffered']
    #allocation7 [shape = 's32[1]{0}', space=sflag, size = 0x4, scoped, tag = 'scoped memory for tpu_custom_call.1']
    %9 = vsyncpa [#allocation7], 0
    // Predicated region
    $region2: #{tpu_custom_call.1} parent=1 // pred_check
      _
    $region3: #{tpu_custom_call.1} parent=1 // pred_check_branch
      %11 = sbr.rel (0) target = $region5
    $region4: #{tpu_custom_call.1} parent=1 // pred_region
      _
    $region5: #{tpu_custom_call.1} parent=1 // pred_fallthru
      _
    // Predicated region
    $region6: #{tpu_custom_call.1} parent=1 // pred_check
      _
    $region7: #{tpu_custom_call.1} parent=1 // pred_check_branch
      %13 = sbr.rel (0) target = $region9
    $region8: #{tpu_custom_call.1} parent=1 // pred_region
      %s15 = ssub.s32 2048, 2048
      %16 = vsyncadd [#allocation7], %s15
      %s17 = sshll.u32 [#allocation6], 4
      %s18 = int_to_ptr.vmem [resolvable:$true] %s17
      %23 = dma.hbm_to_vmem [thread:$0]  %s1, 2048, %s18, [#allocation7], 128, 128, 8
    $region9: #{tpu_custom_call.1} parent=1 // pred_fallthru
      _
    // Predicated region
    $region10: #{tpu_custom_call.1} parent=1 // pred_check
      _
    $region11: #{tpu_custom_call.1} parent=1 // pred_check_branch
      %25 = sbr.rel (0) target = $region13
    $region12: #{tpu_custom_call.1} parent=1 // pred_region
      _
    $region13: #{tpu_custom_call.1} parent=1 // pred_fallthru
      _
    // Predicated region
    $region14: #{tpu_custom_call.1} parent=1 // pred_check
      _
    $region15: #{tpu_custom_call.1} parent=1 // pred_check_branch
      %27 = sbr.rel (0) target = $region17
    $region16: #{tpu_custom_call.1} parent=1 // pred_region
      _
    $region17: #{tpu_custom_call.1} parent=1 // pred_fallthru
      _
    // Predicated region
    $region18: #{tpu_custom_call.1} parent=1 // pred_check
      _
    $region19: #{tpu_custom_call.1} parent=1 // pred_check_branch
      %29 = sbr.rel (0) target = $region21
    $region20: #{tpu_custom_call.1} parent=1 // pred_region
      %30 = dma.done [#allocation7], 2048
    $region21: #{tpu_custom_call.1} parent=1 // pred_fallthru
      _
    %p31 = scmp.eq.s32.totalorder 0, 0
    // Predicated region
    $region22: #{tpu_custom_call.1} parent=1 // pred_check
      %p32 = pneg %p31
    $region23: #{tpu_custom_call.1} parent=1 // pred_check_branch
      %34 = sbr.rel (%p32) target = $region25
    $region24: #{tpu_custom_call.1} parent=1 // pred_region
      %vm35 = vcmask 7168
      %36 = vst.msk [vmem:[#allocation2] sm:$0xff] %vm35, -1e+30
      %37 = vst.msk [vmem:[#allocation2 + $0x8] sm:$0xff] %vm35, -1e+30
      %38 = vst.msk [vmem:[#allocation2 + $0x10] sm:$0xff] %vm35, -1e+30
      %39 = vst.msk [vmem:[#allocation2 + $0x18] sm:$0xff] %vm35, -1e+30
      %40 = vst.msk [vmem:[#allocation2 + $0x20] sm:$0xff] %vm35, -1e+30
      %41 = vst.msk [vmem:[#allocation2 + $0x28] sm:$0xff] %vm35, -1e+30
      %42 = vst.msk [vmem:[#allocation2 + $0x30] sm:$0xff] %vm35, -1e+30
      %43 = vst.msk [vmem:[#allocation2 + $0x38] sm:$0xff] %vm35, -1e+30
      %44 = vst.msk [vmem:[#allocation2 + $0x40] sm:$0xff] %vm35, -1e+30
      %45 = vst.msk [vmem:[#allocation2 + $0x48] sm:$0xff] %vm35, -1e+30
      %46 = vst.msk [vmem:[#allocation2 + $0x50] sm:$0xff] %vm35, -1e+30
      %47 = vst.msk [vmem:[#allocation2 + $0x58] sm:$0xff] %vm35, -1e+30
      %48 = vst.msk [vmem:[#allocation2 + $0x60] sm:$0xff] %vm35, -1e+30
      %49 = vst.msk [vmem:[#allocation2 + $0x68] sm:$0xff] %vm35, -1e+30
      %50 = vst.msk [vmem:[#allocation2 + $0x70] sm:$0xff] %vm35, -1e+30
      %51 = vst.msk [vmem:[#allocation2 + $0x78] sm:$0xff] %vm35, -1e+30
      %52 = vst.msk [vmem:[#allocation3] sm:$0xff] %vm35, 0.0
      %53 = vst.msk [vmem:[#allocation3 + $0x8] sm:$0xff] %vm35, 0.0
      %54 = vst.msk [vmem:[#allocation3 + $0x10] sm:$0xff] %vm35, 0.0
      %55 = vst.msk [vmem:[#allocation3 + $0x18] sm:$0xff] %vm35, 0.0
      %56 = vst.msk [vmem:[#allocation3 + $0x20] sm:$0xff] %vm35, 0.0
      %57 = vst.msk [vmem:[#allocation3 + $0x28] sm:$0xff] %vm35, 0.0
      %58 = vst.msk [vmem:[#allocation3 + $0x30] sm:$0xff] %vm35, 0.0
      %59 = vst.msk [vmem:[#allocation3 + $0x38] sm:$0xff] %vm35, 0.0
      %60 = vst.msk [vmem:[#allocation3 + $0x40] sm:$0xff] %vm35, 0.0
      %61 = vst.msk [vmem:[#allocation3 + $0x48] sm:$0xff] %vm35, 0.0
      %62 = vst.msk [vmem:[#allocation3 + $0x50] sm:$0xff] %vm35, 0.0
      %63 = vst.msk [vmem:[#allocation3 + $0x58] sm:$0xff] %vm35, 0.0
      %64 = vst.msk [vmem:[#allocation3 + $0x60] sm:$0xff] %vm35, 0.0
      %65 = vst.msk [vmem:[#allocation3 + $0x68] sm:$0xff] %vm35, 0.0
      %66 = vst.msk [vmem:[#allocation3 + $0x70] sm:$0xff] %vm35, 0.0
      %67 = vst.msk [vmem:[#allocation3 + $0x78] sm:$0xff] %vm35, 0.0
      %68 = vst.msk [vmem:[#allocation4] sm:$0xff] %vm35, 0.0
      %69 = vst.msk [vmem:[#allocation4 + $0x8] sm:$0xff] %vm35, 0.0
      %70 = vst.msk [vmem:[#allocation4 + $0x10] sm:$0xff] %vm35, 0.0
      %71 = vst.msk [vmem:[#allocation4 + $0x18] sm:$0xff] %vm35, 0.0
      %72 = vst.msk [vmem:[#allocation4 + $0x20] sm:$0xff] %vm35, 0.0
      %73 = vst.msk [vmem:[#allocation4 + $0x28] sm:$0xff] %vm35, 0.0
      %74 = vst.msk [vmem:[#allocation4 + $0x30] sm:$0xff] %vm35, 0.0
      %75 = vst.msk [vmem:[#allocation4 + $0x38] sm:$0xff] %vm35, 0.0
      %76 = vst.msk [vmem:[#allocation4 + $0x40] sm:$0xff] %vm35, 0.0
      %77 = vst.msk [vmem:[#allocation4 + $0x48] sm:$0xff] %vm35, 0.0
      %78 = vst.msk [vmem:[#allocation4 + $0x50] sm:$0xff] %vm35, 0.0
      %79 = vst.msk [vmem:[#allocation4 + $0x58] sm:$0xff] %vm35, 0.0
      %80 = vst.msk [vmem:[#allocation4 + $0x60] sm:$0xff] %vm35, 0.0
      %81 = vst.msk [vmem:[#allocation4 + $0x68] sm:$0xff] %vm35, 0.0
      %82 = vst.msk [vmem:[#allocation4 + $0x70] sm:$0xff] %vm35, 0.0
      %83 = vst.msk [vmem:[#allocation4 + $0x78] sm:$0xff] %vm35, 0.0
      %84 = vst.msk [vmem:[#allocation5] sm:$0xff] %vm35, 0.0
      %85 = vst.msk [vmem:[#allocation5 + $0x8] sm:$0xff] %vm35, 0.0
      %86 = vst.msk [vmem:[#allocation5 + $0x10] sm:$0xff] %vm35, 0.0
      %87 = vst.msk [vmem:[#allocation5 + $0x18] sm:$0xff] %vm35, 0.0
      %88 = vst.msk [vmem:[#allocation5 + $0x20] sm:$0xff] %vm35, 0.0
      %89 = vst.msk [vmem:[#allocation5 + $0x28] sm:$0xff] %vm35, 0.0
      %90 = vst.msk [vmem:[#allocation5 + $0x30] sm:$0xff] %vm35, 0.0
      %91 = vst.msk [vmem:[#allocation5 + $0x38] sm:$0xff] %vm35, 0.0
      %92 = vst.msk [vmem:[#allocation5 + $0x40] sm:$0xff] %vm35, 0.0
      %93 = vst.msk [vmem:[#allocation5 + $0x48] sm:$0xff] %vm35, 0.0
      %94 = vst.msk [vmem:[#allocation5 + $0x50] sm:$0xff] %vm35, 0.0
      %95 = vst.msk [vmem:[#allocation5 + $0x58] sm:$0xff] %vm35, 0.0
      %96 = vst.msk [vmem:[#allocation5 + $0x60] sm:$0xff] %vm35, 0.0
      %97 = vst.msk [vmem:[#allocation5 + $0x68] sm:$0xff] %vm35, 0.0
      %98 = vst.msk [vmem:[#allocation5 + $0x70] sm:$0xff] %vm35, 0.0
      %99 = vst.msk [vmem:[#allocation5 + $0x78] sm:$0xff] %vm35, 0.0
    $region25: #{tpu_custom_call.1} parent=1 // pred_fallthru
      _
    %v100 = vld [vmem:[%s0] sm:$0xff]
    %v101 = vld [vmem:[%s0 + $0x8] sm:$0xff]
    %v102 = vld [vmem:[%s0 + $0x10] sm:$0xff]
    %v103 = vld [vmem:[%s0 + $0x18] sm:$0xff]
    %v104 = vld [vmem:[%s0 + $0x20] sm:$0xff]
    %v105 = vld [vmem:[%s0 + $0x28] sm:$0xff]
    %v106 = vld [vmem:[%s0 + $0x30] sm:$0xff]
    %v107 = vld [vmem:[%s0 + $0x38] sm:$0xff]
    %v108 = vld [vmem:[%s0 + $0x40] sm:$0xff]
    %v109 = vld [vmem:[%s0 + $0x48] sm:$0xff]
    %v110 = vld [vmem:[%s0 + $0x50] sm:$0xff]
    %v111 = vld [vmem:[%s0 + $0x58] sm:$0xff]
    %v112 = vld [vmem:[%s0 + $0x60] sm:$0xff]
    %v113 = vld [vmem:[%s0 + $0x68] sm:$0xff]
    %v114 = vld [vmem:[%s0 + $0x70] sm:$0xff]
    %v115 = vld [vmem:[%s0 + $0x78] sm:$0xff]
    %v116 = vld [vmem:[#allocation6] sm:$0xff]
    %v117 = vld [vmem:[#allocation6 + $0x8] sm:$0xff]
    %v118 = vld [vmem:[#allocation6 + $0x10] sm:$0xff]
    %v119 = vld [vmem:[#allocation6 + $0x18] sm:$0xff]
    %v120 = vld [vmem:[#allocation6 + $0x20] sm:$0xff]
    %v121 = vld [vmem:[#allocation6 + $0x28] sm:$0xff]
    %v122 = vld [vmem:[#allocation6 + $0x30] sm:$0xff]
    %v123 = vld [vmem:[#allocation6 + $0x38] sm:$0xff]
    %v124 = vld [vmem:[#allocation6 + $0x40] sm:$0xff]
    %v125 = vld [vmem:[#allocation6 + $0x48] sm:$0xff]
    %v126 = vld [vmem:[#allocation6 + $0x50] sm:$0xff]
    %v127 = vld [vmem:[#allocation6 + $0x58] sm:$0xff]
    %v128 = vld [vmem:[#allocation6 + $0x60] sm:$0xff]
    %v129 = vld [vmem:[#allocation6 + $0x68] sm:$0xff]
    %v130 = vld [vmem:[#allocation6 + $0x70] sm:$0xff]
    %v131 = vld [vmem:[#allocation6 + $0x78] sm:$0xff]
    %132 = vmatprep.subr.mxu0 0.0
    %133 = vmatpush1.xpose.msra.mxu0 %v116
    %134 = vmatprep.subr.mxu0 0.0
    %135 = vmatpush1.xpose.msra.mxu0 %v117
    %136 = vmatprep.subr.mxu0 0.0
    %137 = vmatpush1.xpose.msra.mxu0 %v118
    %138 = vmatprep.subr.mxu0 0.0
    %139 = vmatpush1.xpose.msra.mxu0 %v119
    %140 = vmatprep.subr.mxu0 0.0
    %141 = vmatpush1.xpose.msra.mxu0 %v120
    %142 = vmatprep.subr.mxu0 0.0
    %143 = vmatpush1.xpose.msra.mxu0 %v121
    %144 = vmatprep.subr.mxu0 0.0
    %145 = vmatpush1.xpose.msra.mxu0 %v122
    %146 = vmatprep.subr.mxu0 0.0
    %147 = vmatpush1.xpose.msra.mxu0 %v123
    %148 = vmatprep.subr.mxu0 0.0
    %149 = vmatpush1.xpose.msra.mxu0 %v124
    %150 = vmatprep.subr.mxu0 0.0
    %151 = vmatpush1.xpose.msra.mxu0 %v125
    %152 = vmatprep.subr.mxu0 0.0
    %153 = vmatpush1.xpose.msra.mxu0 %v126
    %154 = vmatprep.subr.mxu0 0.0
    %155 = vmatpush1.xpose.msra.mxu0 %v127
    %156 = vmatprep.subr.mxu0 0.0
    %157 = vmatpush1.xpose.msra.mxu0 %v128
    %158 = vmatprep.subr.mxu0 0.0
    %159 = vmatpush1.xpose.msra.mxu0 %v129
    %160 = vmatprep.subr.mxu0 0.0
    %161 = vmatpush1.xpose.msra.mxu0 %v130
    %162 = vmatprep.subr.mxu0 0.0
    %163 = vmatpush1.xpose.msra.mxu0 %v131
    %164 = vmatprep.subr.mxu0 0.0
    %165 = vmatpush1.xpose.msra.mxu0 0.0
    %166 = vmatprep.subr.mxu0 0.0
    %167 = vmatpush1.xpose.msra.mxu0 0.0
    %168 = vmatprep.subr.mxu0 0.0
    %169 = vmatpush1.xpose.msra.mxu0 0.0
    %170 = vmatprep.subr.mxu0 0.0
    %171 = vmatpush1.xpose.msra.mxu0 0.0
    %172 = vmatprep.subr.mxu0 0.0
    %173 = vmatpush1.xpose.msra.mxu0 0.0
    %174 = vmatprep.subr.mxu0 0.0
    %175 = vmatpush1.xpose.msra.mxu0 0.0
    %176 = vmatprep.subr.mxu0 0.0
    %177 = vmatpush1.xpose.msra.mxu0 0.0
    %178 = vmatprep.subr.mxu0 0.0
    %179 = vmatpush1.xpose.msra.mxu0 0.0
    %180 = vmatprep.subr.mxu0 0.0
    %181 = vmatpush1.xpose.msra.mxu0 0.0
    %182 = vmatprep.subr.mxu0 0.0
    %183 = vmatpush1.xpose.msra.mxu0 0.0
    %184 = vmatprep.subr.mxu0 0.0
    %185 = vmatpush1.xpose.msra.mxu0 0.0
    %186 = vmatprep.subr.mxu0 0.0
    %187 = vmatpush1.xpose.msra.mxu0 0.0
    %188 = vmatprep.subr.mxu0 0.0
    %189 = vmatpush1.xpose.msra.mxu0 0.0
    %190 = vmatprep.subr.mxu0 0.0
    %191 = vmatpush1.xpose.msra.mxu0 0.0
    %192 = vmatprep.subr.mxu0 0.0
    %193 = vmatpush1.xpose.msra.mxu0 0.0
    %194 = vmatprep.subr.mxu0 0.0
    %195 = vmatpush1.xpose.msra.mxu0 0.0
    %196 = vmatprep.mubr.f32.mxu0 0.0
    %197 = vmatmul.mubr.f32.gmra.mrb[0].mxu0 %v100
    %v198 = vpop.f32.mrb[0].mxu0
    %v199 = vadd.f32 0.0, %v198
    %v200 = vpop.f32.mrb[0].mxu0
    %201 = vmatprep.mubr.f32.mxu0 0.0
    %202 = vmatmul.mubr.f32.gmra.mrb[0].mxu0 %v101
    %v203 = vpop.f32.mrb[0].mxu0
    %v204 = vadd.f32 0.0, %v203
    %v205 = vpop.f32.mrb[0].mxu0
    %206 = vmatprep.mubr.f32.mxu0 0.0
    %207 = vmatmul.mubr.f32.gmra.mrb[0].mxu0 %v102
    %v208 = vpop.f32.mrb[0].mxu0
    %v209 = vadd.f32 0.0, %v208
    %v210 = vpop.f32.mrb[0].mxu0
    %211 = vmatprep.mubr.f32.mxu0 0.0
    %212 = vmatmul.mubr.f32.gmra.mrb[0].mxu0 %v103
    %v213 = vpop.f32.mrb[0].mxu0
    %v214 = vadd.f32 0.0, %v213
    %v215 = vpop.f32.mrb[0].mxu0
    %216 = vmatprep.mubr.f32.mxu0 0.0
    %217 = vmatmul.mubr.f32.gmra.mrb[0].mxu0 %v104
    %v218 = vpop.f32.mrb[0].mxu0
    %v219 = vadd.f32 0.0, %v218
    %v220 = vpop.f32.mrb[0].mxu0
    %221 = vmatprep.mubr.f32.mxu0 0.0
    %222 = vmatmul.mubr.f32.gmra.mrb[0].mxu0 %v105
    %v223 = vpop.f32.mrb[0].mxu0
    %v224 = vadd.f32 0.0, %v223
    %v225 = vpop.f32.mrb[0].mxu0
    %226 = vmatprep.mubr.f32.mxu0 0.0
    %227 = vmatmul.mubr.f32.gmra.mrb[0].mxu0 %v106
    %v228 = vpop.f32.mrb[0].mxu0
    %v229 = vadd.f32 0.0, %v228
    %v230 = vpop.f32.mrb[0].mxu0
    %231 = vmatprep.mubr.f32.mxu0 0.0
    %232 = vmatmul.mubr.f32.gmra.mrb[0].mxu0 %v107
    %v233 = vpop.f32.mrb[0].mxu0
    %v234 = vadd.f32 0.0, %v233
    %v235 = vpop.f32.mrb[0].mxu0
    %236 = vmatprep.mubr.f32.mxu0 0.0
    %237 = vmatmul.mubr.f32.gmra.mrb[0].mxu0 %v108
    %v238 = vpop.f32.mrb[0].mxu0
    %v239 = vadd.f32 0.0, %v238
    %v240 = vpop.f32.mrb[0].mxu0
    %241 = vmatprep.mubr.f32.mxu0 0.0
    %242 = vmatmul.mubr.f32.gmra.mrb[0].mxu0 %v109
    %v243 = vpop.f32.mrb[0].mxu0
    %v244 = vadd.f32 0.0, %v243
    %v245 = vpop.f32.mrb[0].mxu0
    %246 = vmatprep.mubr.f32.mxu0 0.0
    %247 = vmatmul.mubr.f32.gmra.mrb[0].mxu0 %v110
    %v248 = vpop.f32.mrb[0].mxu0
    %v249 = vadd.f32 0.0, %v248
    %v250 = vpop.f32.mrb[0].mxu0
    %251 = vmatprep.mubr.f32.mxu0 0.0
    %252 = vmatmul.mubr.f32.gmra.mrb[0].mxu0 %v111
    %v253 = vpop.f32.mrb[0].mxu0
    %v254 = vadd.f32 0.0, %v253
    %v255 = vpop.f32.mrb[0].mxu0
    %256 = vmatprep.mubr.f32.mxu0 0.0
    %257 = vmatmul.mubr.f32.gmra.mrb[0].mxu0 %v112
    %v258 = vpop.f32.mrb[0].mxu0
    %v259 = vadd.f32 0.0, %v258
    %v260 = vpop.f32.mrb[0].mxu0
    %261 = vmatprep.mubr.f32.mxu0 0.0
    %262 = vmatmul.mubr.f32.gmra.mrb[0].mxu0 %v113
    %v263 = vpop.f32.mrb[0].mxu0
    %v264 = vadd.f32 0.0, %v263
    %v265 = vpop.f32.mrb[0].mxu0
    %266 = vmatprep.mubr.f32.mxu0 0.0
    %267 = vmatmul.mubr.f32.gmra.mrb[0].mxu0 %v114
    %v268 = vpop.f32.mrb[0].mxu0
    %v269 = vadd.f32 0.0, %v268
    %v270 = vpop.f32.mrb[0].mxu0
    %271 = vmatprep.mubr.f32.mxu0 0.0
    %272 = vmatmul.mubr.f32.gmra.mrb[0].mxu0 %v115
    %v273 = vpop.f32.mrb[0].mxu0
    %v274 = vadd.f32 0.0, %v273
    %v275 = vpop.f32.mrb[0].mxu0
    %276 = vdwg.mxu0
    %v277 = vmul.f32 %v199, 14.285714
    %v278 = vmul.f32 %v204, 14.285714
    %v279 = vmul.f32 %v209, 14.285714
    %v280 = vmul.f32 %v214, 14.285714
    %v281 = vmul.f32 %v219, 14.285714
    %v282 = vmul.f32 %v224, 14.285714
    %v283 = vmul.f32 %v229, 14.285714
    %v284 = vmul.f32 %v234, 14.285714
    %v285 = vmul.f32 %v239, 14.285714
    %v286 = vmul.f32 %v244, 14.285714
    %v287 = vmul.f32 %v249, 14.285714
    %v288 = vmul.f32 %v254, 14.285714
    %v289 = vmul.f32 %v259, 14.285714
    %v290 = vmul.f32 %v264, 14.285714
    %v291 = vmul.f32 %v269, 14.285714
    %v292 = vmul.f32 %v274, 14.285714
    %293 = vmax.xlane.f32.xlu0 %v277
    %v294 = vpop.xlane.xlu0 %293
    %295 = vmax.xlane.f32.xlu0 %v278
    %v296 = vpop.xlane.xlu0 %295
    %297 = vmax.xlane.f32.xlu0 %v279
    %v298 = vpop.xlane.xlu0 %297
    %299 = vmax.xlane.f32.xlu0 %v280
    %v300 = vpop.xlane.xlu0 %299
    %301 = vmax.xlane.f32.xlu0 %v281
    %v302 = vpop.xlane.xlu0 %301
    %303 = vmax.xlane.f32.xlu0 %v282
    %v304 = vpop.xlane.xlu0 %303
    %305 = vmax.xlane.f32.xlu0 %v283
    %v306 = vpop.xlane.xlu0 %305
    %307 = vmax.xlane.f32.xlu0 %v284
    %v308 = vpop.xlane.xlu0 %307
    %309 = vmax.xlane.f32.xlu0 %v285
    %v310 = vpop.xlane.xlu0 %309
    %311 = vmax.xlane.f32.xlu0 %v286
    %v312 = vpop.xlane.xlu0 %311
    %313 = vmax.xlane.f32.xlu0 %v287
    %v314 = vpop.xlane.xlu0 %313
    %315 = vmax.xlane.f32.xlu0 %v288
    %v316 = vpop.xlane.xlu0 %315
    %317 = vmax.xlane.f32.xlu0 %v289
    %v318 = vpop.xlane.xlu0 %317
    %319 = vmax.xlane.f32.xlu0 %v290
    %v320 = vpop.xlane.xlu0 %319
    %321 = vmax.xlane.f32.xlu0 %v291
    %v322 = vpop.xlane.xlu0 %321
    %323 = vmax.xlane.f32.xlu0 %v292
    %v324 = vpop.xlane.xlu0 %323
    %v325 = vld [vmem:[#allocation2] sm:$0xff]
    %v326 = vld [vmem:[#allocation2 + $0x8] sm:$0xff]
    %v327 = vld [vmem:[#allocation2 + $0x10] sm:$0xff]
    %v328 = vld [vmem:[#allocation2 + $0x18] sm:$0xff]
    %v329 = vld [vmem:[#allocation2 + $0x20] sm:$0xff]
    %v330 = vld [vmem:[#allocation2 + $0x28] sm:$0xff]
    %v331 = vld [vmem:[#allocation2 + $0x30] sm:$0xff]
    %v332 = vld [vmem:[#allocation2 + $0x38] sm:$0xff]
    %v333 = vld [vmem:[#allocation2 + $0x40] sm:$0xff]
    %v334 = vld [vmem:[#allocation2 + $0x48] sm:$0xff]
    %v335 = vld [vmem:[#allocation2 + $0x50] sm:$0xff]
    %v336 = vld [vmem:[#allocation2 + $0x58] sm:$0xff]
    %v337 = vld [vmem:[#allocation2 + $0x60] sm:$0xff]
    %v338 = vld [vmem:[#allocation2 + $0x68] sm:$0xff]
    %v339 = vld [vmem:[#allocation2 + $0x70] sm:$0xff]
    %v340 = vld [vmem:[#allocation2 + $0x78] sm:$0xff]
    %v341 = vmax.f32 %v325, %v294
    %v342 = vmax.f32 %v326, %v296
    %v343 = vmax.f32 %v327, %v298
    %v344 = vmax.f32 %v328, %v300
    %v345 = vmax.f32 %v329, %v302
    %v346 = vmax.f32 %v330, %v304
    %v347 = vmax.f32 %v331, %v306
    %v348 = vmax.f32 %v332, %v308
    %v349 = vmax.f32 %v333, %v310
    %v350 = vmax.f32 %v334, %v312
    %v351 = vmax.f32 %v335, %v314
    %v352 = vmax.f32 %v336, %v316
    %v353 = vmax.f32 %v337, %v318
    %v354 = vmax.f32 %v338, %v320
    %v355 = vmax.f32 %v339, %v322
    %v356 = vmax.f32 %v340, %v324
    %v357 = vsub.f32 %v325, %v341
    %v358 = vsub.f32 %v326, %v342
    %v359 = vsub.f32 %v327, %v343
    %v360 = vsub.f32 %v328, %v344
    %v361 = vsub.f32 %v329, %v345
    %v362 = vsub.f32 %v330, %v346
    %v363 = vsub.f32 %v331, %v347
    %v364 = vsub.f32 %v332, %v348
    %v365 = vsub.f32 %v333, %v349
    %v366 = vsub.f32 %v334, %v350
    %v367 = vsub.f32 %v335, %v351
    %v368 = vsub.f32 %v336, %v352
    %v369 = vsub.f32 %v337, %v353
    %v370 = vsub.f32 %v338, %v354
    %v371 = vsub.f32 %v339, %v355
    %v372 = vsub.f32 %v340, %v356
    %v373 = vmul.f32 %v357, 1.442695
    %v374 = vpow.pop %v373
    %v375 = vmul.f32 %v358, 1.442695
    %v376 = vpow.pop %v375
    %v377 = vmul.f32 %v359, 1.442695
    %v378 = vpow.pop %v377
    %v379 = vmul.f32 %v360, 1.442695
    %v380 = vpow.pop %v379
    %v381 = vmul.f32 %v361, 1.442695
    %v382 = vpow.pop %v381
    %v383 = vmul.f32 %v362, 1.442695
    %v384 = vpow.pop %v383
    %v385 = vmul.f32 %v363, 1.442695
    %v386 = vpow.pop %v385
    %v387 = vmul.f32 %v364, 1.442695
    %v388 = vpow.pop %v387
    %v389 = vmul.f32 %v365, 1.442695
    %v390 = vpow.pop %v389
    %v391 = vmul.f32 %v366, 1.442695
    %v392 = vpow.pop %v391
    %v393 = vmul.f32 %v367, 1.442695
    %v394 = vpow.pop %v393
    %v395 = vmul.f32 %v368, 1.442695
    %v396 = vpow.pop %v395
    %v397 = vmul.f32 %v369, 1.442695
    %v398 = vpow.pop %v397
    %v399 = vmul.f32 %v370, 1.442695
    %v400 = vpow.pop %v399
    %v401 = vmul.f32 %v371, 1.442695
    %v402 = vpow.pop %v401
    %v403 = vmul.f32 %v372, 1.442695
    %v404 = vpow.pop %v403
    %v405 = vld [vmem:[%s2] sm:$0xff]
    %v406 = vld [vmem:[%s2 + $0x8] sm:$0xff]
    %v407 = vld [vmem:[%s2 + $0x10] sm:$0xff]
    %v408 = vld [vmem:[%s2 + $0x18] sm:$0xff]
    %v409 = vld [vmem:[%s2 + $0x20] sm:$0xff]
    %v410 = vld [vmem:[%s2 + $0x28] sm:$0xff]
    %v411 = vld [vmem:[%s2 + $0x30] sm:$0xff]
    %v412 = vld [vmem:[%s2 + $0x38] sm:$0xff]
    %v413 = vld [vmem:[%s2 + $0x40] sm:$0xff]
    %v414 = vld [vmem:[%s2 + $0x48] sm:$0xff]
    %v415 = vld [vmem:[%s2 + $0x50] sm:$0xff]
    %v416 = vld [vmem:[%s2 + $0x58] sm:$0xff]
    %v417 = vld [vmem:[%s2 + $0x60] sm:$0xff]
    %v418 = vld [vmem:[%s2 + $0x68] sm:$0xff]
    %v419 = vld [vmem:[%s2 + $0x70] sm:$0xff]
    %v420 = vld [vmem:[%s2 + $0x78] sm:$0xff]
    %v421 = vld [vmem:[%s3] sm:$0x1]
    %422 = vset.pattern.permute.xlu0 0
    %423 = vperm.xlu0 %422, %v405
    %v424 = vpop.permute.xlu0 %423
    %425 = vset.pattern.permute.xlu0 0
    %426 = vperm.xlu0 %425, %v406
    %v427 = vpop.permute.xlu0 %426
    %428 = vset.pattern.permute.xlu0 0
    %429 = vperm.xlu0 %428, %v407
    %v430 = vpop.permute.xlu0 %429
    %431 = vset.pattern.permute.xlu0 0
    %432 = vperm.xlu0 %431, %v408
    %v433 = vpop.permute.xlu0 %432
    %434 = vset.pattern.permute.xlu0 0
    %435 = vperm.xlu0 %434, %v409
    %v436 = vpop.permute.xlu0 %435
    %437 = vset.pattern.permute.xlu0 0
    %438 = vperm.xlu0 %437, %v410
    %v439 = vpop.permute.xlu0 %438
    %440 = vset.pattern.permute.xlu0 0
    %441 = vperm.xlu0 %440, %v411
    %v442 = vpop.permute.xlu0 %441
    %443 = vset.pattern.permute.xlu0 0
    %444 = vperm.xlu0 %443, %v412
    %v445 = vpop.permute.xlu0 %444
    %446 = vset.pattern.permute.xlu0 0
    %447 = vperm.xlu0 %446, %v413
    %v448 = vpop.permute.xlu0 %447
    %449 = vset.pattern.permute.xlu0 0
    %450 = vperm.xlu0 %449, %v414
    %v451 = vpop.permute.xlu0 %450
    %452 = vset.pattern.permute.xlu0 0
    %453 = vperm.xlu0 %452, %v415
    %v454 = vpop.permute.xlu0 %453
    %455 = vset.pattern.permute.xlu0 0
    %456 = vperm.xlu0 %455, %v416
    %v457 = vpop.permute.xlu0 %456
    %458 = vset.pattern.permute.xlu0 0
    %459 = vperm.xlu0 %458, %v417
    %v460 = vpop.permute.xlu0 %459
    %461 = vset.pattern.permute.xlu0 0
    %462 = vperm.xlu0 %461, %v418
    %v463 = vpop.permute.xlu0 %462
    %464 = vset.pattern.permute.xlu0 0
    %465 = vperm.xlu0 %464, %v419
    %v466 = vpop.permute.xlu0 %465
    %467 = vset.pattern.permute.xlu0 0
    %468 = vperm.xlu0 %467, %v420
    %v469 = vpop.permute.xlu0 %468
    %v470 = vlaneseq
    %v471 = vshrl.u32 %v470, 7
    %v472 = vsub.s32 0, %v471
    %v473 = vrot.slane %v421, %v472
    %vm474 = vcmp.eq.s32.totalorder %v424, %v473
    %vm475 = vcmp.eq.s32.totalorder %v427, %v473
    %vm476 = vcmp.eq.s32.totalorder %v430, %v473
    %vm477 = vcmp.eq.s32.totalorder %v433, %v473
    %vm478 = vcmp.eq.s32.totalorder %v436, %v473
    %vm479 = vcmp.eq.s32.totalorder %v439, %v473
    %vm480 = vcmp.eq.s32.totalorder %v442, %v473
    %vm481 = vcmp.eq.s32.totalorder %v445, %v473
    %vm482 = vcmp.eq.s32.totalorder %v448, %v473
    %vm483 = vcmp.eq.s32.totalorder %v451, %v473
    %vm484 = vcmp.eq.s32.totalorder %v454, %v473
    %vm485 = vcmp.eq.s32.totalorder %v457, %v473
    %vm486 = vcmp.eq.s32.totalorder %v460, %v473
    %vm487 = vcmp.eq.s32.totalorder %v463, %v473
    %vm488 = vcmp.eq.s32.totalorder %v466, %v473
    %vm489 = vcmp.eq.s32.totalorder %v469, %v473
    %s490 = smul.u32 0, 128
    %s491 = sadd.s32 0, 1
    %s492 = smul.u32 %s491, 128
    %p493 = scmp.lt.s32.totalorder %s490, %s492
    %s494 = smul.u32 0, 128
    %s495 = sadd.s32 0, 1
    %s496 = smul.u32 %s495, 128
    %p497 = scmp.lt.s32.totalorder %s494, %s496
    %p498 = pnand %p493, %p497
    %p499 = pneg %p498
    %p500 = por %p31, %p499
    // Predicated region
    $region26: #{tpu_custom_call.1} parent=1 // pred_check
      %p501 = pneg %p500
    $region27: #{tpu_custom_call.1} parent=1 // pred_check_branch
      %503 = sbr.rel (%p501) target = $region29
    $region28: #{tpu_custom_call.1} parent=1 // pred_region
      %v504 = vlaneseq
      %v505 = vand.u32 %v504, 127
      %v506 = vstv %s494
      %v507 = vadd.s32 %v506, %v505
      %v508 = vlaneseq
      %v509 = vshrl.u32 %v508, 7
      %v510 = vadd.s32 %v509, 8
      %v511 = vadd.s32 %v509, 16
      %v512 = vadd.s32 %v509, 24
      %v513 = vadd.s32 %v509, 32
      %v514 = vadd.s32 %v509, 40
      %v515 = vadd.s32 %v509, 48
      %v516 = vadd.s32 %v509, 56
      %v517 = vadd.s32 %v509, 64
      %v518 = vadd.s32 %v509, 72
      %v519 = vadd.s32 %v509, 80
      %v520 = vadd.s32 %v509, 88
      %v521 = vadd.s32 %v509, 96
      %v522 = vadd.s32 %v509, 104
      %v523 = vadd.s32 %v509, 112
      %v524 = vadd.s32 %v509, 120
      %v525 = vstv %s490
      %v526 = vadd.s32 %v525, %v509
      %v527 = vadd.s32 %v525, %v510
      %v528 = vadd.s32 %v525, %v511
      %v529 = vadd.s32 %v525, %v512
      %v530 = vadd.s32 %v525, %v513
      %v531 = vadd.s32 %v525, %v514
      %v532 = vadd.s32 %v525, %v515
      %v533 = vadd.s32 %v525, %v516
      %v534 = vadd.s32 %v525, %v517
      %v535 = vadd.s32 %v525, %v518
      %v536 = vadd.s32 %v525, %v519
      %v537 = vadd.s32 %v525, %v520
      %v538 = vadd.s32 %v525, %v521
      %v539 = vadd.s32 %v525, %v522
      %v540 = vadd.s32 %v525, %v523
      %v541 = vadd.s32 %v525, %v524
      %vm542 = vcmp.lt.s32.totalorder %v507, 16
      %vm543 = vcmp.ne.s32.totalorder %v526, %v507
      %vm544 = vcmp.ne.s32.totalorder %v527, %v507
      %vm545 = vcmp.ne.s32.totalorder %v528, %v507
      %vm546 = vcmp.ne.s32.totalorder %v529, %v507
      %vm547 = vcmp.ne.s32.totalorder %v530, %v507
      %vm548 = vcmp.ne.s32.totalorder %v531, %v507
      %vm549 = vcmp.ne.s32.totalorder %v532, %v507
      %vm550 = vcmp.ne.s32.totalorder %v533, %v507
      %vm551 = vcmp.ne.s32.totalorder %v534, %v507
      %vm552 = vcmp.ne.s32.totalorder %v535, %v507
      %vm553 = vcmp.ne.s32.totalorder %v536, %v507
      %vm554 = vcmp.ne.s32.totalorder %v537, %v507
      %vm555 = vcmp.ne.s32.totalorder %v538, %v507
      %vm556 = vcmp.ne.s32.totalorder %v539, %v507
      %vm557 = vcmp.ne.s32.totalorder %v540, %v507
      %vm558 = vcmp.ne.s32.totalorder %v541, %v507
      %v559 = vsel %vm542, 1, 0
      %vm560 = vcmp.eq.s32.totalorder %v559, 1
      %vm561 = vmand %vm560, %vm543
      %vm562 = vmand %vm560, %vm544
      %vm563 = vmand %vm560, %vm545
      %vm564 = vmand %vm560, %vm546
      %vm565 = vmand %vm560, %vm547
      %vm566 = vmand %vm560, %vm548
      %vm567 = vmand %vm560, %vm549
      %vm568 = vmand %vm560, %vm550
      %vm569 = vmand %vm560, %vm551
      %vm570 = vmand %vm560, %vm552
      %vm571 = vmand %vm560, %vm553
      %vm572 = vmand %vm560, %vm554
      %vm573 = vmand %vm560, %vm555
      %vm574 = vmand %vm560, %vm556
      %vm575 = vmand %vm560, %vm557
      %vm576 = vmand %vm560, %vm558
      %v577 = vsel %vm561, %v277, -1e+30
      %v578 = vsel %vm562, %v278, -1e+30
      %v579 = vsel %vm563, %v279, -1e+30
      %v580 = vsel %vm564, %v280, -1e+30
      %v581 = vsel %vm565, %v281, -1e+30
      %v582 = vsel %vm566, %v282, -1e+30
      %v583 = vsel %vm567, %v283, -1e+30
      %v584 = vsel %vm568, %v284, -1e+30
      %v585 = vsel %vm569, %v285, -1e+30
      %v586 = vsel %vm570, %v286, -1e+30
      %v587 = vsel %vm571, %v287, -1e+30
      %v588 = vsel %vm572, %v288, -1e+30
      %v589 = vsel %vm573, %v289, -1e+30
      %v590 = vsel %vm574, %v290, -1e+30
      %v591 = vsel %vm575, %v291, -1e+30
      %v592 = vsel %vm576, %v292, -1e+30
      %594 = vset.pattern.permute.xlu0 0
      %595 = vperm.xlu0 %594, %v341
      %v596 = vpop.permute.xlu0 %595
      %599 = vset.pattern.permute.xlu0 0
      %600 = vperm.xlu0 %599, %v342
      %v601 = vpop.permute.xlu0 %600
      %604 = vset.pattern.permute.xlu0 0
      %605 = vperm.xlu0 %604, %v343
      %v606 = vpop.permute.xlu0 %605
      %609 = vset.pattern.permute.xlu0 0
      %610 = vperm.xlu0 %609, %v344
      %v611 = vpop.permute.xlu0 %610
      %614 = vset.pattern.permute.xlu0 0
      %615 = vperm.xlu0 %614, %v345
      %v616 = vpop.permute.xlu0 %615
      %619 = vset.pattern.permute.xlu0 0
      %620 = vperm.xlu0 %619, %v346
      %v621 = vpop.permute.xlu0 %620
      %624 = vset.pattern.permute.xlu0 0
      %625 = vperm.xlu0 %624, %v347
      %v626 = vpop.permute.xlu0 %625
      %629 = vset.pattern.permute.xlu0 0
      %630 = vperm.xlu0 %629, %v348
      %v631 = vpop.permute.xlu0 %630
      %634 = vset.pattern.permute.xlu0 0
      %635 = vperm.xlu0 %634, %v349
      %v636 = vpop.permute.xlu0 %635
      %639 = vset.pattern.permute.xlu0 0
      %640 = vperm.xlu0 %639, %v350
      %v641 = vpop.permute.xlu0 %640
      %644 = vset.pattern.permute.xlu0 0
      %645 = vperm.xlu0 %644, %v351
      %v646 = vpop.permute.xlu0 %645
      %649 = vset.pattern.permute.xlu0 0
      %650 = vperm.xlu0 %649, %v352
      %v651 = vpop.permute.xlu0 %650
      %654 = vset.pattern.permute.xlu0 0
      %655 = vperm.xlu0 %654, %v353
      %v656 = vpop.permute.xlu0 %655
      %659 = vset.pattern.permute.xlu0 0
      %660 = vperm.xlu0 %659, %v354
      %v661 = vpop.permute.xlu0 %660
      %664 = vset.pattern.permute.xlu0 0
      %665 = vperm.xlu0 %664, %v355
      %v666 = vpop.permute.xlu0 %665
      %669 = vset.pattern.permute.xlu0 0
      %670 = vperm.xlu0 %669, %v356
      %v671 = vpop.permute.xlu0 %670
      %v673 = vsub.f32 %v577, %v596
      %v674 = vsub.f32 %v578, %v601
      %v675 = vsub.f32 %v579, %v606
      %v676 = vsub.f32 %v580, %v611
      %v677 = vsub.f32 %v581, %v616
      %v678 = vsub.f32 %v582, %v621
      %v679 = vsub.f32 %v583, %v626
      %v680 = vsub.f32 %v584, %v631
      %v681 = vsub.f32 %v585, %v636
      %v682 = vsub.f32 %v586, %v641
      %v683 = vsub.f32 %v587, %v646
      %v684 = vsub.f32 %v588, %v651
      %v685 = vsub.f32 %v589, %v656
      %v686 = vsub.f32 %v590, %v661
      %v687 = vsub.f32 %v591, %v666
      %v688 = vsub.f32 %v592, %v671
      %v689 = vmul.f32 %v673, 1.442695
      %v690 = vpow.pop %v689
      %v691 = vmul.f32 %v674, 1.442695
      %v692 = vpow.pop %v691
      %v693 = vmul.f32 %v675, 1.442695
      %v694 = vpow.pop %v693
      %v695 = vmul.f32 %v676, 1.442695
      %v696 = vpow.pop %v695
      %v697 = vmul.f32 %v677, 1.442695
      %v698 = vpow.pop %v697
      %v699 = vmul.f32 %v678, 1.442695
      %v700 = vpow.pop %v699
      %v701 = vmul.f32 %v679, 1.442695
      %v702 = vpow.pop %v701
      %v703 = vmul.f32 %v680, 1.442695
      %v704 = vpow.pop %v703
      %v705 = vmul.f32 %v681, 1.442695
      %v706 = vpow.pop %v705
      %v707 = vmul.f32 %v682, 1.442695
      %v708 = vpow.pop %v707
      %v709 = vmul.f32 %v683, 1.442695
      %v710 = vpow.pop %v709
      %v711 = vmul.f32 %v684, 1.442695
      %v712 = vpow.pop %v711
      %v713 = vmul.f32 %v685, 1.442695
      %v714 = vpow.pop %v713
      %v715 = vmul.f32 %v686, 1.442695
      %v716 = vpow.pop %v715
      %v717 = vmul.f32 %v687, 1.442695
      %v718 = vpow.pop %v717
      %v719 = vmul.f32 %v688, 1.442695
      %v720 = vpow.pop %v719
      %vm721 = vmand %vm474, %vm561
      %vm722 = vmand %vm475, %vm562
      %vm723 = vmand %vm476, %vm563
      %vm724 = vmand %vm477, %vm564
      %vm725 = vmand %vm478, %vm565
      %vm726 = vmand %vm479, %vm566
      %vm727 = vmand %vm480, %vm567
      %vm728 = vmand %vm481, %vm568
      %vm729 = vmand %vm482, %vm569
      %vm730 = vmand %vm483, %vm570
      %vm731 = vmand %vm484, %vm571
      %vm732 = vmand %vm485, %vm572
      %vm733 = vmand %vm486, %vm573
      %vm734 = vmand %vm487, %vm574
      %vm735 = vmand %vm488, %vm575
      %vm736 = vmand %vm489, %vm576
      %v737 = vsel %vm721, 1, 0
      %v738 = vsel %vm722, 1, 0
      %v739 = vsel %vm723, 1, 0
      %v740 = vsel %vm724, 1, 0
      %v741 = vsel %vm725, 1, 0
      %v742 = vsel %vm726, 1, 0
      %v743 = vsel %vm727, 1, 0
      %v744 = vsel %vm728, 1, 0
      %v745 = vsel %vm729, 1, 0
      %v746 = vsel %vm730, 1, 0
      %v747 = vsel %vm731, 1, 0
      %v748 = vsel %vm732, 1, 0
      %v749 = vsel %vm733, 1, 0
      %v750 = vsel %vm734, 1, 0
      %v751 = vsel %vm735, 1, 0
      %v752 = vsel %vm736, 1, 0
      %v753 = vcvt.s32.f32 %v737
      %v754 = vcvt.s32.f32 %v738
      %v755 = vcvt.s32.f32 %v739
      %v756 = vcvt.s32.f32 %v740
      %v757 = vcvt.s32.f32 %v741
      %v758 = vcvt.s32.f32 %v742
      %v759 = vcvt.s32.f32 %v743
      %v760 = vcvt.s32.f32 %v744
      %v761 = vcvt.s32.f32 %v745
      %v762 = vcvt.s32.f32 %v746
      %v763 = vcvt.s32.f32 %v747
      %v764 = vcvt.s32.f32 %v748
      %v765 = vcvt.s32.f32 %v749
      %v766 = vcvt.s32.f32 %v750
      %v767 = vcvt.s32.f32 %v751
      %v768 = vcvt.s32.f32 %v752
      %v769 = vld [vmem:[#allocation3] sm:$0xff]
      %v770 = vld [vmem:[#allocation3 + $0x8] sm:$0xff]
      %v771 = vld [vmem:[#allocation3 + $0x10] sm:$0xff]
      %v772 = vld [vmem:[#allocation3 + $0x18] sm:$0xff]
      %v773 = vld [vmem:[#allocation3 + $0x20] sm:$0xff]
      %v774 = vld [vmem:[#allocation3 + $0x28] sm:$0xff]
      %v775 = vld [vmem:[#allocation3 + $0x30] sm:$0xff]
      %v776 = vld [vmem:[#allocation3 + $0x38] sm:$0xff]
      %v777 = vld [vmem:[#allocation3 + $0x40] sm:$0xff]
      %v778 = vld [vmem:[#allocation3 + $0x48] sm:$0xff]
      %v779 = vld [vmem:[#allocation3 + $0x50] sm:$0xff]
      %v780 = vld [vmem:[#allocation3 + $0x58] sm:$0xff]
      %v781 = vld [vmem:[#allocation3 + $0x60] sm:$0xff]
      %v782 = vld [vmem:[#allocation3 + $0x68] sm:$0xff]
      %v783 = vld [vmem:[#allocation3 + $0x70] sm:$0xff]
      %v784 = vld [vmem:[#allocation3 + $0x78] sm:$0xff]
      %v785 = vmul.f32 %v374, %v769
      %v786 = vmul.f32 %v376, %v770
      %v787 = vmul.f32 %v378, %v771
      %v788 = vmul.f32 %v380, %v772
      %v789 = vmul.f32 %v382, %v773
      %v790 = vmul.f32 %v384, %v774
      %v791 = vmul.f32 %v386, %v775
      %v792 = vmul.f32 %v388, %v776
      %v793 = vmul.f32 %v390, %v777
      %v794 = vmul.f32 %v392, %v778
      %v795 = vmul.f32 %v394, %v779
      %v796 = vmul.f32 %v396, %v780
      %v797 = vmul.f32 %v398, %v781
      %v798 = vmul.f32 %v400, %v782
      %v799 = vmul.f32 %v402, %v783
      %v800 = vmul.f32 %v404, %v784
      %801 = vadd.xlane.f32.xlu0 %v690
      %v802 = vpop.xlane.xlu0 %801
      %803 = vadd.xlane.f32.xlu0 %v692
      %v804 = vpop.xlane.xlu0 %803
      %805 = vadd.xlane.f32.xlu0 %v694
      %v806 = vpop.xlane.xlu0 %805
      %807 = vadd.xlane.f32.xlu0 %v696
      %v808 = vpop.xlane.xlu0 %807
      %809 = vadd.xlane.f32.xlu0 %v698
      %v810 = vpop.xlane.xlu0 %809
      %811 = vadd.xlane.f32.xlu0 %v700
      %v812 = vpop.xlane.xlu0 %811
      %813 = vadd.xlane.f32.xlu0 %v702
      %v814 = vpop.xlane.xlu0 %813
      %815 = vadd.xlane.f32.xlu0 %v704
      %v816 = vpop.xlane.xlu0 %815
      %817 = vadd.xlane.f32.xlu0 %v706
      %v818 = vpop.xlane.xlu0 %817
      %819 = vadd.xlane.f32.xlu0 %v708
      %v820 = vpop.xlane.xlu0 %819
      %821 = vadd.xlane.f32.xlu0 %v710
      %v822 = vpop.xlane.xlu0 %821
      %823 = vadd.xlane.f32.xlu0 %v712
      %v824 = vpop.xlane.xlu0 %823
      %825 = vadd.xlane.f32.xlu0 %v714
      %v826 = vpop.xlane.xlu0 %825
      %827 = vadd.xlane.f32.xlu0 %v716
      %v828 = vpop.xlane.xlu0 %827
      %829 = vadd.xlane.f32.xlu0 %v718
      %v830 = vpop.xlane.xlu0 %829
      %831 = vadd.xlane.f32.xlu0 %v720
      %v832 = vpop.xlane.xlu0 %831
      %v833 = vadd.f32 %v785, %v802
      %v834 = vadd.f32 %v786, %v804
      %v835 = vadd.f32 %v787, %v806
      %v836 = vadd.f32 %v788, %v808
      %v837 = vadd.f32 %v789, %v810
      %v838 = vadd.f32 %v790, %v812
      %v839 = vadd.f32 %v791, %v814
      %v840 = vadd.f32 %v792, %v816
      %v841 = vadd.f32 %v793, %v818
      %v842 = vadd.f32 %v794, %v820
      %v843 = vadd.f32 %v795, %v822
      %v844 = vadd.f32 %v796, %v824
      %v845 = vadd.f32 %v797, %v826
      %v846 = vadd.f32 %v798, %v828
      %v847 = vadd.f32 %v799, %v830
      %v848 = vadd.f32 %v800, %v832
      %vm849 = vcmask 7168
      %850 = vst.msk [vmem:[#allocation3] sm:$0xff] %vm849, %v833
      %851 = vst.msk [vmem:[#allocation3 + $0x8] sm:$0xff] %vm849, %v834
      %852 = vst.msk [vmem:[#allocation3 + $0x10] sm:$0xff] %vm849, %v835
      %853 = vst.msk [vmem:[#allocation3 + $0x18] sm:$0xff] %vm849, %v836
      %854 = vst.msk [vmem:[#allocation3 + $0x20] sm:$0xff] %vm849, %v837
      %855 = vst.msk [vmem:[#allocation3 + $0x28] sm:$0xff] %vm849, %v838
      %856 = vst.msk [vmem:[#allocation3 + $0x30] sm:$0xff] %vm849, %v839
      %857 = vst.msk [vmem:[#allocation3 + $0x38] sm:$0xff] %vm849, %v840
      %858 = vst.msk [vmem:[#allocation3 + $0x40] sm:$0xff] %vm849, %v841
      %859 = vst.msk [vmem:[#allocation3 + $0x48] sm:$0xff] %vm849, %v842
      %860 = vst.msk [vmem:[#allocation3 + $0x50] sm:$0xff] %vm849, %v843
      %861 = vst.msk [vmem:[#allocation3 + $0x58] sm:$0xff] %vm849, %v844
      %862 = vst.msk [vmem:[#allocation3 + $0x60] sm:$0xff] %vm849, %v845
      %863 = vst.msk [vmem:[#allocation3 + $0x68] sm:$0xff] %vm849, %v846
      %864 = vst.msk [vmem:[#allocation3 + $0x70] sm:$0xff] %vm849, %v847
      %865 = vst.msk [vmem:[#allocation3 + $0x78] sm:$0xff] %vm849, %v848
      %v866 = vld [vmem:[#allocation4] sm:$0xff]
      %v867 = vld [vmem:[#allocation4 + $0x8] sm:$0xff]
      %v868 = vld [vmem:[#allocation4 + $0x10] sm:$0xff]
      %v869 = vld [vmem:[#allocation4 + $0x18] sm:$0xff]
      %v870 = vld [vmem:[#allocation4 + $0x20] sm:$0xff]
      %v871 = vld [vmem:[#allocation4 + $0x28] sm:$0xff]
      %v872 = vld [vmem:[#allocation4 + $0x30] sm:$0xff]
      %v873 = vld [vmem:[#allocation4 + $0x38] sm:$0xff]
      %v874 = vld [vmem:[#allocation4 + $0x40] sm:$0xff]
      %v875 = vld [vmem:[#allocation4 + $0x48] sm:$0xff]
      %v876 = vld [vmem:[#allocation4 + $0x50] sm:$0xff]
      %v877 = vld [vmem:[#allocation4 + $0x58] sm:$0xff]
      %v878 = vld [vmem:[#allocation4 + $0x60] sm:$0xff]
      %v879 = vld [vmem:[#allocation4 + $0x68] sm:$0xff]
      %v880 = vld [vmem:[#allocation4 + $0x70] sm:$0xff]
      %v881 = vld [vmem:[#allocation4 + $0x78] sm:$0xff]
      %v882 = vmul.f32 %v753, %v277
      %v883 = vmul.f32 %v754, %v278
      %v884 = vmul.f32 %v755, %v279
      %v885 = vmul.f32 %v756, %v280
      %v886 = vmul.f32 %v757, %v281
      %v887 = vmul.f32 %v758, %v282
      %v888 = vmul.f32 %v759, %v283
      %v889 = vmul.f32 %v760, %v284
      %v890 = vmul.f32 %v761, %v285
      %v891 = vmul.f32 %v762, %v286
      %v892 = vmul.f32 %v763, %v287
      %v893 = vmul.f32 %v764, %v288
      %v894 = vmul.f32 %v765, %v289
      %v895 = vmul.f32 %v766, %v290
      %v896 = vmul.f32 %v767, %v291
      %v897 = vmul.f32 %v768, %v292
      %898 = vadd.xlane.f32.xlu0 %v882
      %v899 = vpop.xlane.xlu0 %898
      %900 = vadd.xlane.f32.xlu0 %v883
      %v901 = vpop.xlane.xlu0 %900
      %902 = vadd.xlane.f32.xlu0 %v884
      %v903 = vpop.xlane.xlu0 %902
      %904 = vadd.xlane.f32.xlu0 %v885
      %v905 = vpop.xlane.xlu0 %904
      %906 = vadd.xlane.f32.xlu0 %v886
      %v907 = vpop.xlane.xlu0 %906
      %908 = vadd.xlane.f32.xlu0 %v887
      %v909 = vpop.xlane.xlu0 %908
      %910 = vadd.xlane.f32.xlu0 %v888
      %v911 = vpop.xlane.xlu0 %910
      %912 = vadd.xlane.f32.xlu0 %v889
      %v913 = vpop.xlane.xlu0 %912
      %914 = vadd.xlane.f32.xlu0 %v890
      %v915 = vpop.xlane.xlu0 %914
      %916 = vadd.xlane.f32.xlu0 %v891
      %v917 = vpop.xlane.xlu0 %916
      %918 = vadd.xlane.f32.xlu0 %v892
      %v919 = vpop.xlane.xlu0 %918
      %920 = vadd.xlane.f32.xlu0 %v893
      %v921 = vpop.xlane.xlu0 %920
      %922 = vadd.xlane.f32.xlu0 %v894
      %v923 = vpop.xlane.xlu0 %922
      %924 = vadd.xlane.f32.xlu0 %v895
      %v925 = vpop.xlane.xlu0 %924
      %926 = vadd.xlane.f32.xlu0 %v896
      %v927 = vpop.xlane.xlu0 %926
      %928 = vadd.xlane.f32.xlu0 %v897
      %v929 = vpop.xlane.xlu0 %928
      %v930 = vadd.f32 %v866, %v899
      %v931 = vadd.f32 %v867, %v901
      %v932 = vadd.f32 %v868, %v903
      %v933 = vadd.f32 %v869, %v905
      %v934 = vadd.f32 %v870, %v907
      %v935 = vadd.f32 %v871, %v909
      %v936 = vadd.f32 %v872, %v911
      %v937 = vadd.f32 %v873, %v913
      %v938 = vadd.f32 %v874, %v915
      %v939 = vadd.f32 %v875, %v917
      %v940 = vadd.f32 %v876, %v919
      %v941 = vadd.f32 %v877, %v921
      %v942 = vadd.f32 %v878, %v923
      %v943 = vadd.f32 %v879, %v925
      %v944 = vadd.f32 %v880, %v927
      %v945 = vadd.f32 %v881, %v929
      %946 = vst.msk [vmem:[#allocation4] sm:$0xff] %vm849, %v930
      %947 = vst.msk [vmem:[#allocation4 + $0x8] sm:$0xff] %vm849, %v931
      %948 = vst.msk [vmem:[#allocation4 + $0x10] sm:$0xff] %vm849, %v932
      %949 = vst.msk [vmem:[#allocation4 + $0x18] sm:$0xff] %vm849, %v933
      %950 = vst.msk [vmem:[#allocation4 + $0x20] sm:$0xff] %vm849, %v934
      %951 = vst.msk [vmem:[#allocation4 + $0x28] sm:$0xff] %vm849, %v935
      %952 = vst.msk [vmem:[#allocation4 + $0x30] sm:$0xff] %vm849, %v936
      %953 = vst.msk [vmem:[#allocation4 + $0x38] sm:$0xff] %vm849, %v937
      %954 = vst.msk [vmem:[#allocation4 + $0x40] sm:$0xff] %vm849, %v938
      %955 = vst.msk [vmem:[#allocation4 + $0x48] sm:$0xff] %vm849, %v939
      %956 = vst.msk [vmem:[#allocation4 + $0x50] sm:$0xff] %vm849, %v940
      %957 = vst.msk [vmem:[#allocation4 + $0x58] sm:$0xff] %vm849, %v941
      %958 = vst.msk [vmem:[#allocation4 + $0x60] sm:$0xff] %vm849, %v942
      %959 = vst.msk [vmem:[#allocation4 + $0x68] sm:$0xff] %vm849, %v943
      %960 = vst.msk [vmem:[#allocation4 + $0x70] sm:$0xff] %vm849, %v944
      %961 = vst.msk [vmem:[#allocation4 + $0x78] sm:$0xff] %vm849, %v945
      %v962 = vld [vmem:[#allocation5] sm:$0xff]
      %v963 = vld [vmem:[#allocation5 + $0x8] sm:$0xff]
      %v964 = vld [vmem:[#allocation5 + $0x10] sm:$0xff]
      %v965 = vld [vmem:[#allocation5 + $0x18] sm:$0xff]
      %v966 = vld [vmem:[#allocation5 + $0x20] sm:$0xff]
      %v967 = vld [vmem:[#allocation5 + $0x28] sm:$0xff]
      %v968 = vld [vmem:[#allocation5 + $0x30] sm:$0xff]
      %v969 = vld [vmem:[#allocation5 + $0x38] sm:$0xff]
      %v970 = vld [vmem:[#allocation5 + $0x40] sm:$0xff]
      %v971 = vld [vmem:[#allocation5 + $0x48] sm:$0xff]
      %v972 = vld [vmem:[#allocation5 + $0x50] sm:$0xff]
      %v973 = vld [vmem:[#allocation5 + $0x58] sm:$0xff]
      %v974 = vld [vmem:[#allocation5 + $0x60] sm:$0xff]
      %v975 = vld [vmem:[#allocation5 + $0x68] sm:$0xff]
      %v976 = vld [vmem:[#allocation5 + $0x70] sm:$0xff]
      %v977 = vld [vmem:[#allocation5 + $0x78] sm:$0xff]
      %978 = vadd.xlane.f32.xlu0 %v753
      %v979 = vpop.xlane.xlu0 %978
      %980 = vadd.xlane.f32.xlu0 %v754
      %v981 = vpop.xlane.xlu0 %980
      %982 = vadd.xlane.f32.xlu0 %v755
      %v983 = vpop.xlane.xlu0 %982
      %984 = vadd.xlane.f32.xlu0 %v756
      %v985 = vpop.xlane.xlu0 %984
      %986 = vadd.xlane.f32.xlu0 %v757
      %v987 = vpop.xlane.xlu0 %986
      %988 = vadd.xlane.f32.xlu0 %v758
      %v989 = vpop.xlane.xlu0 %988
      %990 = vadd.xlane.f32.xlu0 %v759
      %v991 = vpop.xlane.xlu0 %990
      %992 = vadd.xlane.f32.xlu0 %v760
      %v993 = vpop.xlane.xlu0 %992
      %994 = vadd.xlane.f32.xlu0 %v761
      %v995 = vpop.xlane.xlu0 %994
      %996 = vadd.xlane.f32.xlu0 %v762
      %v997 = vpop.xlane.xlu0 %996
      %998 = vadd.xlane.f32.xlu0 %v763
      %v999 = vpop.xlane.xlu0 %998
      %1000 = vadd.xlane.f32.xlu0 %v764
      %v1001 = vpop.xlane.xlu0 %1000
      %1002 = vadd.xlane.f32.xlu0 %v765
      %v1003 = vpop.xlane.xlu0 %1002
      %1004 = vadd.xlane.f32.xlu0 %v766
      %v1005 = vpop.xlane.xlu0 %1004
      %1006 = vadd.xlane.f32.xlu0 %v767
      %v1007 = vpop.xlane.xlu0 %1006
      %1008 = vadd.xlane.f32.xlu0 %v768
      %v1009 = vpop.xlane.xlu0 %1008
      %v1010 = vadd.f32 %v962, %v979
      %v1011 = vadd.f32 %v963, %v981
      %v1012 = vadd.f32 %v964, %v983
      %v1013 = vadd.f32 %v965, %v985
      %v1014 = vadd.f32 %v966, %v987
      %v1015 = vadd.f32 %v967, %v989
      %v1016 = vadd.f32 %v968, %v991
      %v1017 = vadd.f32 %v969, %v993
      %v1018 = vadd.f32 %v970, %v995
      %v1019 = vadd.f32 %v971, %v997
      %v1020 = vadd.f32 %v972, %v999
      %v1021 = vadd.f32 %v973, %v1001
      %v1022 = vadd.f32 %v974, %v1003
      %v1023 = vadd.f32 %v975, %v1005
      %v1024 = vadd.f32 %v976, %v1007
      %v1025 = vadd.f32 %v977, %v1009
      %1026 = vst.msk [vmem:[#allocation5] sm:$0xff] %vm849, %v1010
      %1027 = vst.msk [vmem:[#allocation5 + $0x8] sm:$0xff] %vm849, %v1011
      %1028 = vst.msk [vmem:[#allocation5 + $0x10] sm:$0xff] %vm849, %v1012
      %1029 = vst.msk [vmem:[#allocation5 + $0x18] sm:$0xff] %vm849, %v1013
      %1030 = vst.msk [vmem:[#allocation5 + $0x20] sm:$0xff] %vm849, %v1014
      %1031 = vst.msk [vmem:[#allocation5 + $0x28] sm:$0xff] %vm849, %v1015
      %1032 = vst.msk [vmem:[#allocation5 + $0x30] sm:$0xff] %vm849, %v1016
      %1033 = vst.msk [vmem:[#allocation5 + $0x38] sm:$0xff] %vm849, %v1017
      %1034 = vst.msk [vmem:[#allocation5 + $0x40] sm:$0xff] %vm849, %v1018
      %1035 = vst.msk [vmem:[#allocation5 + $0x48] sm:$0xff] %vm849, %v1019
      %1036 = vst.msk [vmem:[#allocation5 + $0x50] sm:$0xff] %vm849, %v1020
      %1037 = vst.msk [vmem:[#allocation5 + $0x58] sm:$0xff] %vm849, %v1021
      %1038 = vst.msk [vmem:[#allocation5 + $0x60] sm:$0xff] %vm849, %v1022
      %1039 = vst.msk [vmem:[#allocation5 + $0x68] sm:$0xff] %vm849, %v1023
      %1040 = vst.msk [vmem:[#allocation5 + $0x70] sm:$0xff] %vm849, %v1024
      %1041 = vst.msk [vmem:[#allocation5 + $0x78] sm:$0xff] %vm849, %v1025
    $region29: #{tpu_custom_call.1} parent=1 // pred_fallthru
      _
    %p1042 = pneg %p500
    // Predicated region
    $region30: #{tpu_custom_call.1} parent=1 // pred_check
      _
    $region31: #{tpu_custom_call.1} parent=1 // pred_check_branch
      %1044 = sbr.rel (%p500) target = $region33
    $region32: #{tpu_custom_call.1} parent=1 // pred_region
      %1046 = vset.pattern.permute.xlu0 0
      %1047 = vperm.xlu0 %1046, %v341
      %v1048 = vpop.permute.xlu0 %1047
      %1051 = vset.pattern.permute.xlu0 0
      %1052 = vperm.xlu0 %1051, %v342
      %v1053 = vpop.permute.xlu0 %1052
      %1056 = vset.pattern.permute.xlu0 0
      %1057 = vperm.xlu0 %1056, %v343
      %v1058 = vpop.permute.xlu0 %1057
      %1061 = vset.pattern.permute.xlu0 0
      %1062 = vperm.xlu0 %1061, %v344
      %v1063 = vpop.permute.xlu0 %1062
      %1066 = vset.pattern.permute.xlu0 0
      %1067 = vperm.xlu0 %1066, %v345
      %v1068 = vpop.permute.xlu0 %1067
      %1071 = vset.pattern.permute.xlu0 0
      %1072 = vperm.xlu0 %1071, %v346
      %v1073 = vpop.permute.xlu0 %1072
      %1076 = vset.pattern.permute.xlu0 0
      %1077 = vperm.xlu0 %1076, %v347
      %v1078 = vpop.permute.xlu0 %1077
      %1081 = vset.pattern.permute.xlu0 0
      %1082 = vperm.xlu0 %1081, %v348
      %v1083 = vpop.permute.xlu0 %1082
      %1086 = vset.pattern.permute.xlu0 0
      %1087 = vperm.xlu0 %1086, %v349
      %v1088 = vpop.permute.xlu0 %1087
      %1091 = vset.pattern.permute.xlu0 0
      %1092 = vperm.xlu0 %1091, %v350
      %v1093 = vpop.permute.xlu0 %1092
      %1096 = vset.pattern.permute.xlu0 0
      %1097 = vperm.xlu0 %1096, %v351
      %v1098 = vpop.permute.xlu0 %1097
      %1101 = vset.pattern.permute.xlu0 0
      %1102 = vperm.xlu0 %1101, %v352
      %v1103 = vpop.permute.xlu0 %1102
      %1106 = vset.pattern.permute.xlu0 0
      %1107 = vperm.xlu0 %1106, %v353
      %v1108 = vpop.permute.xlu0 %1107
      %1111 = vset.pattern.permute.xlu0 0
      %1112 = vperm.xlu0 %1111, %v354
      %v1113 = vpop.permute.xlu0 %1112
      %1116 = vset.pattern.permute.xlu0 0
      %1117 = vperm.xlu0 %1116, %v355
      %v1118 = vpop.permute.xlu0 %1117
      %1121 = vset.pattern.permute.xlu0 0
      %1122 = vperm.xlu0 %1121, %v356
      %v1123 = vpop.permute.xlu0 %1122
      %v1125 = vsub.f32 %v277, %v1048
      %v1126 = vsub.f32 %v278, %v1053
      %v1127 = vsub.f32 %v279, %v1058
      %v1128 = vsub.f32 %v280, %v1063
      %v1129 = vsub.f32 %v281, %v1068
      %v1130 = vsub.f32 %v282, %v1073
      %v1131 = vsub.f32 %v283, %v1078
      %v1132 = vsub.f32 %v284, %v1083
      %v1133 = vsub.f32 %v285, %v1088
      %v1134 = vsub.f32 %v286, %v1093
      %v1135 = vsub.f32 %v287, %v1098
      %v1136 = vsub.f32 %v288, %v1103
      %v1137 = vsub.f32 %v289, %v1108
      %v1138 = vsub.f32 %v290, %v1113
      %v1139 = vsub.f32 %v291, %v1118
      %v1140 = vsub.f32 %v292, %v1123
      %v1141 = vmul.f32 %v1125, 1.442695
      %v1142 = vpow.pop %v1141
      %v1143 = vmul.f32 %v1126, 1.442695
      %v1144 = vpow.pop %v1143
      %v1145 = vmul.f32 %v1127, 1.442695
      %v1146 = vpow.pop %v1145
      %v1147 = vmul.f32 %v1128, 1.442695
      %v1148 = vpow.pop %v1147
      %v1149 = vmul.f32 %v1129, 1.442695
      %v1150 = vpow.pop %v1149
      %v1151 = vmul.f32 %v1130, 1.442695
      %v1152 = vpow.pop %v1151
      %v1153 = vmul.f32 %v1131, 1.442695
      %v1154 = vpow.pop %v1153
      %v1155 = vmul.f32 %v1132, 1.442695
      %v1156 = vpow.pop %v1155
      %v1157 = vmul.f32 %v1133, 1.442695
      %v1158 = vpow.pop %v1157
      %v1159 = vmul.f32 %v1134, 1.442695
      %v1160 = vpow.pop %v1159
      %v1161 = vmul.f32 %v1135, 1.442695
      %v1162 = vpow.pop %v1161
      %v1163 = vmul.f32 %v1136, 1.442695
      %v1164 = vpow.pop %v1163
      %v1165 = vmul.f32 %v1137, 1.442695
      %v1166 = vpow.pop %v1165
      %v1167 = vmul.f32 %v1138, 1.442695
      %v1168 = vpow.pop %v1167
      %v1169 = vmul.f32 %v1139, 1.442695
      %v1170 = vpow.pop %v1169
      %v1171 = vmul.f32 %v1140, 1.442695
      %v1172 = vpow.pop %v1171
      %v1173 = vsel %vm474, 1, 0
      %v1174 = vsel %vm475, 1, 0
      %v1175 = vsel %vm476, 1, 0
      %v1176 = vsel %vm477, 1, 0
      %v1177 = vsel %vm478, 1, 0
      %v1178 = vsel %vm479, 1, 0
      %v1179 = vsel %vm480, 1, 0
      %v1180 = vsel %vm481, 1, 0
      %v1181 = vsel %vm482, 1, 0
      %v1182 = vsel %vm483, 1, 0
      %v1183 = vsel %vm484, 1, 0
      %v1184 = vsel %vm485, 1, 0
      %v1185 = vsel %vm486, 1, 0
      %v1186 = vsel %vm487, 1, 0
      %v1187 = vsel %vm488, 1, 0
      %v1188 = vsel %vm489, 1, 0
      %v1189 = vcvt.s32.f32 %v1173
      %v1190 = vcvt.s32.f32 %v1174
      %v1191 = vcvt.s32.f32 %v1175
      %v1192 = vcvt.s32.f32 %v1176
      %v1193 = vcvt.s32.f32 %v1177
      %v1194 = vcvt.s32.f32 %v1178
      %v1195 = vcvt.s32.f32 %v1179
      %v1196 = vcvt.s32.f32 %v1180
      %v1197 = vcvt.s32.f32 %v1181
      %v1198 = vcvt.s32.f32 %v1182
      %v1199 = vcvt.s32.f32 %v1183
      %v1200 = vcvt.s32.f32 %v1184
      %v1201 = vcvt.s32.f32 %v1185
      %v1202 = vcvt.s32.f32 %v1186
      %v1203 = vcvt.s32.f32 %v1187
      %v1204 = vcvt.s32.f32 %v1188
      %v1205 = vld [vmem:[#allocation3] sm:$0xff]
      %v1206 = vld [vmem:[#allocation3 + $0x8] sm:$0xff]
      %v1207 = vld [vmem:[#allocation3 + $0x10] sm:$0xff]
      %v1208 = vld [vmem:[#allocation3 + $0x18] sm:$0xff]
      %v1209 = vld [vmem:[#allocation3 + $0x20] sm:$0xff]
      %v1210 = vld [vmem:[#allocation3 + $0x28] sm:$0xff]
      %v1211 = vld [vmem:[#allocation3 + $0x30] sm:$0xff]
      %v1212 = vld [vmem:[#allocation3 + $0x38] sm:$0xff]
      %v1213 = vld [vmem:[#allocation3 + $0x40] sm:$0xff]
      %v1214 = vld [vmem:[#allocation3 + $0x48] sm:$0xff]
      %v1215 = vld [vmem:[#allocation3 + $0x50] sm:$0xff]
      %v1216 = vld [vmem:[#allocation3 + $0x58] sm:$0xff]
      %v1217 = vld [vmem:[#allocation3 + $0x60] sm:$0xff]
      %v1218 = vld [vmem:[#allocation3 + $0x68] sm:$0xff]
      %v1219 = vld [vmem:[#allocation3 + $0x70] sm:$0xff]
      %v1220 = vld [vmem:[#allocation3 + $0x78] sm:$0xff]
      %v1221 = vmul.f32 %v374, %v1205
      %v1222 = vmul.f32 %v376, %v1206
      %v1223 = vmul.f32 %v378, %v1207
      %v1224 = vmul.f32 %v380, %v1208
      %v1225 = vmul.f32 %v382, %v1209
      %v1226 = vmul.f32 %v384, %v1210
      %v1227 = vmul.f32 %v386, %v1211
      %v1228 = vmul.f32 %v388, %v1212
      %v1229 = vmul.f32 %v390, %v1213
      %v1230 = vmul.f32 %v392, %v1214
      %v1231 = vmul.f32 %v394, %v1215
      %v1232 = vmul.f32 %v396, %v1216
      %v1233 = vmul.f32 %v398, %v1217
      %v1234 = vmul.f32 %v400, %v1218
      %v1235 = vmul.f32 %v402, %v1219
      %v1236 = vmul.f32 %v404, %v1220
      %1237 = vadd.xlane.f32.xlu0 %v1142
      %v1238 = vpop.xlane.xlu0 %1237
      %1239 = vadd.xlane.f32.xlu0 %v1144
      %v1240 = vpop.xlane.xlu0 %1239
      %1241 = vadd.xlane.f32.xlu0 %v1146
      %v1242 = vpop.xlane.xlu0 %1241
      %1243 = vadd.xlane.f32.xlu0 %v1148
      %v1244 = vpop.xlane.xlu0 %1243
      %1245 = vadd.xlane.f32.xlu0 %v1150
      %v1246 = vpop.xlane.xlu0 %1245
      %1247 = vadd.xlane.f32.xlu0 %v1152
      %v1248 = vpop.xlane.xlu0 %1247
      %1249 = vadd.xlane.f32.xlu0 %v1154
      %v1250 = vpop.xlane.xlu0 %1249
      %1251 = vadd.xlane.f32.xlu0 %v1156
      %v1252 = vpop.xlane.xlu0 %1251
      %1253 = vadd.xlane.f32.xlu0 %v1158
      %v1254 = vpop.xlane.xlu0 %1253
      %1255 = vadd.xlane.f32.xlu0 %v1160
      %v1256 = vpop.xlane.xlu0 %1255
      %1257 = vadd.xlane.f32.xlu0 %v1162
      %v1258 = vpop.xlane.xlu0 %1257
      %1259 = vadd.xlane.f32.xlu0 %v1164
      %v1260 = vpop.xlane.xlu0 %1259
      %1261 = vadd.xlane.f32.xlu0 %v1166
      %v1262 = vpop.xlane.xlu0 %1261
      %1263 = vadd.xlane.f32.xlu0 %v1168
      %v1264 = vpop.xlane.xlu0 %1263
      %1265 = vadd.xlane.f32.xlu0 %v1170
      %v1266 = vpop.xlane.xlu0 %1265
      %1267 = vadd.xlane.f32.xlu0 %v1172
      %v1268 = vpop.xlane.xlu0 %1267
      %v1269 = vadd.f32 %v1221, %v1238
      %v1270 = vadd.f32 %v1222, %v1240
      %v1271 = vadd.f32 %v1223, %v1242
      %v1272 = vadd.f32 %v1224, %v1244
      %v1273 = vadd.f32 %v1225, %v1246
      %v1274 = vadd.f32 %v1226, %v1248
      %v1275 = vadd.f32 %v1227, %v1250
      %v1276 = vadd.f32 %v1228, %v1252
      %v1277 = vadd.f32 %v1229, %v1254
      %v1278 = vadd.f32 %v1230, %v1256
      %v1279 = vadd.f32 %v1231, %v1258
      %v1280 = vadd.f32 %v1232, %v1260
      %v1281 = vadd.f32 %v1233, %v1262
      %v1282 = vadd.f32 %v1234, %v1264
      %v1283 = vadd.f32 %v1235, %v1266
      %v1284 = vadd.f32 %v1236, %v1268
      %vm1285 = vcmask 7168
      %1286 = vst.msk [vmem:[#allocation3] sm:$0xff] %vm1285, %v1269
      %1287 = vst.msk [vmem:[#allocation3 + $0x8] sm:$0xff] %vm1285, %v1270
      %1288 = vst.msk [vmem:[#allocation3 + $0x10] sm:$0xff] %vm1285, %v1271
      %1289 = vst.msk [vmem:[#allocation3 + $0x18] sm:$0xff] %vm1285, %v1272
      %1290 = vst.msk [vmem:[#allocation3 + $0x20] sm:$0xff] %vm1285, %v1273
      %1291 = vst.msk [vmem:[#allocation3 + $0x28] sm:$0xff] %vm1285, %v1274
      %1292 = vst.msk [vmem:[#allocation3 + $0x30] sm:$0xff] %vm1285, %v1275
      %1293 = vst.msk [vmem:[#allocation3 + $0x38] sm:$0xff] %vm1285, %v1276
      %1294 = vst.msk [vmem:[#allocation3 + $0x40] sm:$0xff] %vm1285, %v1277
      %1295 = vst.msk [vmem:[#allocation3 + $0x48] sm:$0xff] %vm1285, %v1278
      %1296 = vst.msk [vmem:[#allocation3 + $0x50] sm:$0xff] %vm1285, %v1279
      %1297 = vst.msk [vmem:[#allocation3 + $0x58] sm:$0xff] %vm1285, %v1280
      %1298 = vst.msk [vmem:[#allocation3 + $0x60] sm:$0xff] %vm1285, %v1281
      %1299 = vst.msk [vmem:[#allocation3 + $0x68] sm:$0xff] %vm1285, %v1282
      %1300 = vst.msk [vmem:[#allocation3 + $0x70] sm:$0xff] %vm1285, %v1283
      %1301 = vst.msk [vmem:[#allocation3 + $0x78] sm:$0xff] %vm1285, %v1284
      %v1302 = vld [vmem:[#allocation4] sm:$0xff]
      %v1303 = vld [vmem:[#allocation4 + $0x8] sm:$0xff]
      %v1304 = vld [vmem:[#allocation4 + $0x10] sm:$0xff]
      %v1305 = vld [vmem:[#allocation4 + $0x18] sm:$0xff]
      %v1306 = vld [vmem:[#allocation4 + $0x20] sm:$0xff]
      %v1307 = vld [vmem:[#allocation4 + $0x28] sm:$0xff]
      %v1308 = vld [vmem:[#allocation4 + $0x30] sm:$0xff]
      %v1309 = vld [vmem:[#allocation4 + $0x38] sm:$0xff]
      %v1310 = vld [vmem:[#allocation4 + $0x40] sm:$0xff]
      %v1311 = vld [vmem:[#allocation4 + $0x48] sm:$0xff]
      %v1312 = vld [vmem:[#allocation4 + $0x50] sm:$0xff]
      %v1313 = vld [vmem:[#allocation4 + $0x58] sm:$0xff]
      %v1314 = vld [vmem:[#allocation4 + $0x60] sm:$0xff]
      %v1315 = vld [vmem:[#allocation4 + $0x68] sm:$0xff]
      %v1316 = vld [vmem:[#allocation4 + $0x70] sm:$0xff]
      %v1317 = vld [vmem:[#allocation4 + $0x78] sm:$0xff]
      %v1318 = vmul.f32 %v1189, %v277
      %v1319 = vmul.f32 %v1190, %v278
      %v1320 = vmul.f32 %v1191, %v279
      %v1321 = vmul.f32 %v1192, %v280
      %v1322 = vmul.f32 %v1193, %v281
      %v1323 = vmul.f32 %v1194, %v282
      %v1324 = vmul.f32 %v1195, %v283
      %v1325 = vmul.f32 %v1196, %v284
      %v1326 = vmul.f32 %v1197, %v285
      %v1327 = vmul.f32 %v1198, %v286
      %v1328 = vmul.f32 %v1199, %v287
      %v1329 = vmul.f32 %v1200, %v288
      %v1330 = vmul.f32 %v1201, %v289
      %v1331 = vmul.f32 %v1202, %v290
      %v1332 = vmul.f32 %v1203, %v291
      %v1333 = vmul.f32 %v1204, %v292
      %1334 = vadd.xlane.f32.xlu0 %v1318
      %v1335 = vpop.xlane.xlu0 %1334
      %1336 = vadd.xlane.f32.xlu0 %v1319
      %v1337 = vpop.xlane.xlu0 %1336
      %1338 = vadd.xlane.f32.xlu0 %v1320
      %v1339 = vpop.xlane.xlu0 %1338
      %1340 = vadd.xlane.f32.xlu0 %v1321
      %v1341 = vpop.xlane.xlu0 %1340
      %1342 = vadd.xlane.f32.xlu0 %v1322
      %v1343 = vpop.xlane.xlu0 %1342
      %1344 = vadd.xlane.f32.xlu0 %v1323
      %v1345 = vpop.xlane.xlu0 %1344
      %1346 = vadd.xlane.f32.xlu0 %v1324
      %v1347 = vpop.xlane.xlu0 %1346
      %1348 = vadd.xlane.f32.xlu0 %v1325
      %v1349 = vpop.xlane.xlu0 %1348
      %1350 = vadd.xlane.f32.xlu0 %v1326
      %v1351 = vpop.xlane.xlu0 %1350
      %1352 = vadd.xlane.f32.xlu0 %v1327
      %v1353 = vpop.xlane.xlu0 %1352
      %1354 = vadd.xlane.f32.xlu0 %v1328
      %v1355 = vpop.xlane.xlu0 %1354
      %1356 = vadd.xlane.f32.xlu0 %v1329
      %v1357 = vpop.xlane.xlu0 %1356
      %1358 = vadd.xlane.f32.xlu0 %v1330
      %v1359 = vpop.xlane.xlu0 %1358
      %1360 = vadd.xlane.f32.xlu0 %v1331
      %v1361 = vpop.xlane.xlu0 %1360
      %1362 = vadd.xlane.f32.xlu0 %v1332
      %v1363 = vpop.xlane.xlu0 %1362
      %1364 = vadd.xlane.f32.xlu0 %v1333
      %v1365 = vpop.xlane.xlu0 %1364
      %v1366 = vadd.f32 %v1302, %v1335
      %v1367 = vadd.f32 %v1303, %v1337
      %v1368 = vadd.f32 %v1304, %v1339
      %v1369 = vadd.f32 %v1305, %v1341
      %v1370 = vadd.f32 %v1306, %v1343
      %v1371 = vadd.f32 %v1307, %v1345
      %v1372 = vadd.f32 %v1308, %v1347
      %v1373 = vadd.f32 %v1309, %v1349
      %v1374 = vadd.f32 %v1310, %v1351
      %v1375 = vadd.f32 %v1311, %v1353
      %v1376 = vadd.f32 %v1312, %v1355
      %v1377 = vadd.f32 %v1313, %v1357
      %v1378 = vadd.f32 %v1314, %v1359
      %v1379 = vadd.f32 %v1315, %v1361
      %v1380 = vadd.f32 %v1316, %v1363
      %v1381 = vadd.f32 %v1317, %v1365
      %1382 = vst.msk [vmem:[#allocation4] sm:$0xff] %vm1285, %v1366
      %1383 = vst.msk [vmem:[#allocation4 + $0x8] sm:$0xff] %vm1285, %v1367
      %1384 = vst.msk [vmem:[#allocation4 + $0x10] sm:$0xff] %vm1285, %v1368
      %1385 = vst.msk [vmem:[#allocation4 + $0x18] sm:$0xff] %vm1285, %v1369
      %1386 = vst.msk [vmem:[#allocation4 + $0x20] sm:$0xff] %vm1285, %v1370
      %1387 = vst.msk [vmem:[#allocation4 + $0x28] sm:$0xff] %vm1285, %v1371
      %1388 = vst.msk [vmem:[#allocation4 + $0x30] sm:$0xff] %vm1285, %v1372
      %1389 = vst.msk [vmem:[#allocation4 + $0x38] sm:$0xff] %vm1285, %v1373
      %1390 = vst.msk [vmem:[#allocation4 + $0x40] sm:$0xff] %vm1285, %v1374
      %1391 = vst.msk [vmem:[#allocation4 + $0x48] sm:$0xff] %vm1285, %v1375
      %1392 = vst.msk [vmem:[#allocation4 + $0x50] sm:$0xff] %vm1285, %v1376
      %1393 = vst.msk [vmem:[#allocation4 + $0x58] sm:$0xff] %vm1285, %v1377
      %1394 = vst.msk [vmem:[#allocation4 + $0x60] sm:$0xff] %vm1285, %v1378
      %1395 = vst.msk [vmem:[#allocation4 + $0x68] sm:$0xff] %vm1285, %v1379
      %1396 = vst.msk [vmem:[#allocation4 + $0x70] sm:$0xff] %vm1285, %v1380
      %1397 = vst.msk [vmem:[#allocation4 + $0x78] sm:$0xff] %vm1285, %v1381
      %v1398 = vld [vmem:[#allocation5] sm:$0xff]
      %v1399 = vld [vmem:[#allocation5 + $0x8] sm:$0xff]
      %v1400 = vld [vmem:[#allocation5 + $0x10] sm:$0xff]
      %v1401 = vld [vmem:[#allocation5 + $0x18] sm:$0xff]
      %v1402 = vld [vmem:[#allocation5 + $0x20] sm:$0xff]
      %v1403 = vld [vmem:[#allocation5 + $0x28] sm:$0xff]
      %v1404 = vld [vmem:[#allocation5 + $0x30] sm:$0xff]
      %v1405 = vld [vmem:[#allocation5 + $0x38] sm:$0xff]
      %v1406 = vld [vmem:[#allocation5 + $0x40] sm:$0xff]
      %v1407 = vld [vmem:[#allocation5 + $0x48] sm:$0xff]
      %v1408 = vld [vmem:[#allocation5 + $0x50] sm:$0xff]
      %v1409 = vld [vmem:[#allocation5 + $0x58] sm:$0xff]
      %v1410 = vld [vmem:[#allocation5 + $0x60] sm:$0xff]
      %v1411 = vld [vmem:[#allocation5 + $0x68] sm:$0xff]
      %v1412 = vld [vmem:[#allocation5 + $0x70] sm:$0xff]
      %v1413 = vld [vmem:[#allocation5 + $0x78] sm:$0xff]
      %1414 = vadd.xlane.f32.xlu0 %v1189
      %v1415 = vpop.xlane.xlu0 %1414
      %1416 = vadd.xlane.f32.xlu0 %v1190
      %v1417 = vpop.xlane.xlu0 %1416
      %1418 = vadd.xlane.f32.xlu0 %v1191
      %v1419 = vpop.xlane.xlu0 %1418
      %1420 = vadd.xlane.f32.xlu0 %v1192
      %v1421 = vpop.xlane.xlu0 %1420
      %1422 = vadd.xlane.f32.xlu0 %v1193
      %v1423 = vpop.xlane.xlu0 %1422
      %1424 = vadd.xlane.f32.xlu0 %v1194
      %v1425 = vpop.xlane.xlu0 %1424
      %1426 = vadd.xlane.f32.xlu0 %v1195
      %v1427 = vpop.xlane.xlu0 %1426
      %1428 = vadd.xlane.f32.xlu0 %v1196
      %v1429 = vpop.xlane.xlu0 %1428
      %1430 = vadd.xlane.f32.xlu0 %v1197
      %v1431 = vpop.xlane.xlu0 %1430
      %1432 = vadd.xlane.f32.xlu0 %v1198
      %v1433 = vpop.xlane.xlu0 %1432
      %1434 = vadd.xlane.f32.xlu0 %v1199
      %v1435 = vpop.xlane.xlu0 %1434
      %1436 = vadd.xlane.f32.xlu0 %v1200
      %v1437 = vpop.xlane.xlu0 %1436
      %1438 = vadd.xlane.f32.xlu0 %v1201
      %v1439 = vpop.xlane.xlu0 %1438
      %1440 = vadd.xlane.f32.xlu0 %v1202
      %v1441 = vpop.xlane.xlu0 %1440
      %1442 = vadd.xlane.f32.xlu0 %v1203
      %v1443 = vpop.xlane.xlu0 %1442
      %1444 = vadd.xlane.f32.xlu0 %v1204
      %v1445 = vpop.xlane.xlu0 %1444
      %v1446 = vadd.f32 %v1398, %v1415
      %v1447 = vadd.f32 %v1399, %v1417
      %v1448 = vadd.f32 %v1400, %v1419
      %v1449 = vadd.f32 %v1401, %v1421
      %v1450 = vadd.f32 %v1402, %v1423
      %v1451 = vadd.f32 %v1403, %v1425
      %v1452 = vadd.f32 %v1404, %v1427
      %v1453 = vadd.f32 %v1405, %v1429
      %v1454 = vadd.f32 %v1406, %v1431
      %v1455 = vadd.f32 %v1407, %v1433
      %v1456 = vadd.f32 %v1408, %v1435
      %v1457 = vadd.f32 %v1409, %v1437
      %v1458 = vadd.f32 %v1410, %v1439
      %v1459 = vadd.f32 %v1411, %v1441
      %v1460 = vadd.f32 %v1412, %v1443
      %v1461 = vadd.f32 %v1413, %v1445
      %1462 = vst.msk [vmem:[#allocation5] sm:$0xff] %vm1285, %v1446
      %1463 = vst.msk [vmem:[#allocation5 + $0x8] sm:$0xff] %vm1285, %v1447
      %1464 = vst.msk [vmem:[#allocation5 + $0x10] sm:$0xff] %vm1285, %v1448
      %1465 = vst.msk [vmem:[#allocation5 + $0x18] sm:$0xff] %vm1285, %v1449
      %1466 = vst.msk [vmem:[#allocation5 + $0x20] sm:$0xff] %vm1285, %v1450
      %1467 = vst.msk [vmem:[#allocation5 + $0x28] sm:$0xff] %vm1285, %v1451
      %1468 = vst.msk [vmem:[#allocation5 + $0x30] sm:$0xff] %vm1285, %v1452
      %1469 = vst.msk [vmem:[#allocation5 + $0x38] sm:$0xff] %vm1285, %v1453
      %1470 = vst.msk [vmem:[#allocation5 + $0x40] sm:$0xff] %vm1285, %v1454
      %1471 = vst.msk [vmem:[#allocation5 + $0x48] sm:$0xff] %vm1285, %v1455
      %1472 = vst.msk [vmem:[#allocation5 + $0x50] sm:$0xff] %vm1285, %v1456
      %1473 = vst.msk [vmem:[#allocation5 + $0x58] sm:$0xff] %vm1285, %v1457
      %1474 = vst.msk [vmem:[#allocation5 + $0x60] sm:$0xff] %vm1285, %v1458
      %1475 = vst.msk [vmem:[#allocation5 + $0x68] sm:$0xff] %vm1285, %v1459
      %1476 = vst.msk [vmem:[#allocation5 + $0x70] sm:$0xff] %vm1285, %v1460
      %1477 = vst.msk [vmem:[#allocation5 + $0x78] sm:$0xff] %vm1285, %v1461
    $region33: #{tpu_custom_call.1} parent=1 // pred_fallthru
      _
    %vm1478 = vcmask 7168
    %1479 = vst.msk [vmem:[#allocation2] sm:$0xff] %vm1478, %v341
    %1480 = vst.msk [vmem:[#allocation2 + $0x8] sm:$0xff] %vm1478, %v342
    %1481 = vst.msk [vmem:[#allocation2 + $0x10] sm:$0xff] %vm1478, %v343
    %1482 = vst.msk [vmem:[#allocation2 + $0x18] sm:$0xff] %vm1478, %v344
    %1483 = vst.msk [vmem:[#allocation2 + $0x20] sm:$0xff] %vm1478, %v345
    %1484 = vst.msk [vmem:[#allocation2 + $0x28] sm:$0xff] %vm1478, %v346
    %1485 = vst.msk [vmem:[#allocation2 + $0x30] sm:$0xff] %vm1478, %v347
    %1486 = vst.msk [vmem:[#allocation2 + $0x38] sm:$0xff] %vm1478, %v348
    %1487 = vst.msk [vmem:[#allocation2 + $0x40] sm:$0xff] %vm1478, %v349
    %1488 = vst.msk [vmem:[#allocation2 + $0x48] sm:$0xff] %vm1478, %v350
    %1489 = vst.msk [vmem:[#allocation2 + $0x50] sm:$0xff] %vm1478, %v351
    %1490 = vst.msk [vmem:[#allocation2 + $0x58] sm:$0xff] %vm1478, %v352
    %1491 = vst.msk [vmem:[#allocation2 + $0x60] sm:$0xff] %vm1478, %v353
    %1492 = vst.msk [vmem:[#allocation2 + $0x68] sm:$0xff] %vm1478, %v354
    %1493 = vst.msk [vmem:[#allocation2 + $0x70] sm:$0xff] %vm1478, %v355
    %1494 = vst.msk [vmem:[#allocation2 + $0x78] sm:$0xff] %vm1478, %v356
    // Predicated region
    $region34: #{tpu_custom_call.1} parent=1 // pred_check
      %p1495 = pneg %p31
    $region35: #{tpu_custom_call.1} parent=1 // pred_check_branch
      %1497 = sbr.rel (%p1495) target = $region37
    $region36: #{tpu_custom_call.1} parent=1 // pred_region
      %v1498 = vld [vmem:[#allocation2] sm:$0xff]
      %v1499 = vld [vmem:[#allocation2 + $0x8] sm:$0xff]
      %v1500 = vld [vmem:[#allocation2 + $0x10] sm:$0xff]
      %v1501 = vld [vmem:[#allocation2 + $0x18] sm:$0xff]
      %v1502 = vld [vmem:[#allocation2 + $0x20] sm:$0xff]
      %v1503 = vld [vmem:[#allocation2 + $0x28] sm:$0xff]
      %v1504 = vld [vmem:[#allocation2 + $0x30] sm:$0xff]
      %v1505 = vld [vmem:[#allocation2 + $0x38] sm:$0xff]
      %v1506 = vld [vmem:[#allocation2 + $0x40] sm:$0xff]
      %v1507 = vld [vmem:[#allocation2 + $0x48] sm:$0xff]
      %v1508 = vld [vmem:[#allocation2 + $0x50] sm:$0xff]
      %v1509 = vld [vmem:[#allocation2 + $0x58] sm:$0xff]
      %v1510 = vld [vmem:[#allocation2 + $0x60] sm:$0xff]
      %v1511 = vld [vmem:[#allocation2 + $0x68] sm:$0xff]
      %v1512 = vld [vmem:[#allocation2 + $0x70] sm:$0xff]
      %v1513 = vld [vmem:[#allocation2 + $0x78] sm:$0xff]
      %v1514 = vld [vmem:[#allocation3] sm:$0xff]
      %v1515 = vld [vmem:[#allocation3 + $0x8] sm:$0xff]
      %v1516 = vld [vmem:[#allocation3 + $0x10] sm:$0xff]
      %v1517 = vld [vmem:[#allocation3 + $0x18] sm:$0xff]
      %v1518 = vld [vmem:[#allocation3 + $0x20] sm:$0xff]
      %v1519 = vld [vmem:[#allocation3 + $0x28] sm:$0xff]
      %v1520 = vld [vmem:[#allocation3 + $0x30] sm:$0xff]
      %v1521 = vld [vmem:[#allocation3 + $0x38] sm:$0xff]
      %v1522 = vld [vmem:[#allocation3 + $0x40] sm:$0xff]
      %v1523 = vld [vmem:[#allocation3 + $0x48] sm:$0xff]
      %v1524 = vld [vmem:[#allocation3 + $0x50] sm:$0xff]
      %v1525 = vld [vmem:[#allocation3 + $0x58] sm:$0xff]
      %v1526 = vld [vmem:[#allocation3 + $0x60] sm:$0xff]
      %v1527 = vld [vmem:[#allocation3 + $0x68] sm:$0xff]
      %v1528 = vld [vmem:[#allocation3 + $0x70] sm:$0xff]
      %v1529 = vld [vmem:[#allocation3 + $0x78] sm:$0xff]
      %v1530 = vlog2.pop %v1514
      %v1531 = vmul.f32 %v1530, 0.6931472
      %v1532 = vlog2.pop %v1515
      %v1533 = vmul.f32 %v1532, 0.6931472
      %v1534 = vlog2.pop %v1516
      %v1535 = vmul.f32 %v1534, 0.6931472
      %v1536 = vlog2.pop %v1517
      %v1537 = vmul.f32 %v1536, 0.6931472
      %v1538 = vlog2.pop %v1518
      %v1539 = vmul.f32 %v1538, 0.6931472
      %v1540 = vlog2.pop %v1519
      %v1541 = vmul.f32 %v1540, 0.6931472
      %v1542 = vlog2.pop %v1520
      %v1543 = vmul.f32 %v1542, 0.6931472
      %v1544 = vlog2.pop %v1521
      %v1545 = vmul.f32 %v1544, 0.6931472
      %v1546 = vlog2.pop %v1522
      %v1547 = vmul.f32 %v1546, 0.6931472
      %v1548 = vlog2.pop %v1523
      %v1549 = vmul.f32 %v1548, 0.6931472
      %v1550 = vlog2.pop %v1524
      %v1551 = vmul.f32 %v1550, 0.6931472
      %v1552 = vlog2.pop %v1525
      %v1553 = vmul.f32 %v1552, 0.6931472
      %v1554 = vlog2.pop %v1526
      %v1555 = vmul.f32 %v1554, 0.6931472
      %v1556 = vlog2.pop %v1527
      %v1557 = vmul.f32 %v1556, 0.6931472
      %v1558 = vlog2.pop %v1528
      %v1559 = vmul.f32 %v1558, 0.6931472
      %v1560 = vlog2.pop %v1529
      %v1561 = vmul.f32 %v1560, 0.6931472
      %v1562 = vadd.f32 %v1498, %v1531
      %v1563 = vadd.f32 %v1499, %v1533
      %v1564 = vadd.f32 %v1500, %v1535
      %v1565 = vadd.f32 %v1501, %v1537
      %v1566 = vadd.f32 %v1502, %v1539
      %v1567 = vadd.f32 %v1503, %v1541
      %v1568 = vadd.f32 %v1504, %v1543
      %v1569 = vadd.f32 %v1505, %v1545
      %v1570 = vadd.f32 %v1506, %v1547
      %v1571 = vadd.f32 %v1507, %v1549
      %v1572 = vadd.f32 %v1508, %v1551
      %v1573 = vadd.f32 %v1509, %v1553
      %v1574 = vadd.f32 %v1510, %v1555
      %v1575 = vadd.f32 %v1511, %v1557
      %v1576 = vadd.f32 %v1512, %v1559
      %v1577 = vadd.f32 %v1513, %v1561
      %v1578 = vld [vmem:[#allocation5] sm:$0xff]
      %v1579 = vld [vmem:[#allocation5 + $0x8] sm:$0xff]
      %v1580 = vld [vmem:[#allocation5 + $0x10] sm:$0xff]
      %v1581 = vld [vmem:[#allocation5 + $0x18] sm:$0xff]
      %v1582 = vld [vmem:[#allocation5 + $0x20] sm:$0xff]
      %v1583 = vld [vmem:[#allocation5 + $0x28] sm:$0xff]
      %v1584 = vld [vmem:[#allocation5 + $0x30] sm:$0xff]
      %v1585 = vld [vmem:[#allocation5 + $0x38] sm:$0xff]
      %v1586 = vld [vmem:[#allocation5 + $0x40] sm:$0xff]
      %v1587 = vld [vmem:[#allocation5 + $0x48] sm:$0xff]
      %v1588 = vld [vmem:[#allocation5 + $0x50] sm:$0xff]
      %v1589 = vld [vmem:[#allocation5 + $0x58] sm:$0xff]
      %v1590 = vld [vmem:[#allocation5 + $0x60] sm:$0xff]
      %v1591 = vld [vmem:[#allocation5 + $0x68] sm:$0xff]
      %v1592 = vld [vmem:[#allocation5 + $0x70] sm:$0xff]
      %v1593 = vld [vmem:[#allocation5 + $0x78] sm:$0xff]
      %vm1594 = vcmp.lt.f32.partialorder %v1578, 1e-06
      %vm1595 = vcmp.lt.f32.partialorder %v1579, 1e-06
      %vm1596 = vcmp.lt.f32.partialorder %v1580, 1e-06
      %vm1597 = vcmp.lt.f32.partialorder %v1581, 1e-06
      %vm1598 = vcmp.lt.f32.partialorder %v1582, 1e-06
      %vm1599 = vcmp.lt.f32.partialorder %v1583, 1e-06
      %vm1600 = vcmp.lt.f32.partialorder %v1584, 1e-06
      %vm1601 = vcmp.lt.f32.partialorder %v1585, 1e-06
      %vm1602 = vcmp.lt.f32.partialorder %v1586, 1e-06
      %vm1603 = vcmp.lt.f32.partialorder %v1587, 1e-06
      %vm1604 = vcmp.lt.f32.partialorder %v1588, 1e-06
      %vm1605 = vcmp.lt.f32.partialorder %v1589, 1e-06
      %vm1606 = vcmp.lt.f32.partialorder %v1590, 1e-06
      %vm1607 = vcmp.lt.f32.partialorder %v1591, 1e-06
      %vm1608 = vcmp.lt.f32.partialorder %v1592, 1e-06
      %vm1609 = vcmp.lt.f32.partialorder %v1593, 1e-06
      %v1610 = vsel %vm1594, 1.0, %v1578
      %v1611 = vsel %vm1595, 1.0, %v1579
      %v1612 = vsel %vm1596, 1.0, %v1580
      %v1613 = vsel %vm1597, 1.0, %v1581
      %v1614 = vsel %vm1598, 1.0, %v1582
      %v1615 = vsel %vm1599, 1.0, %v1583
      %v1616 = vsel %vm1600, 1.0, %v1584
      %v1617 = vsel %vm1601, 1.0, %v1585
      %v1618 = vsel %vm1602, 1.0, %v1586
      %v1619 = vsel %vm1603, 1.0, %v1587
      %v1620 = vsel %vm1604, 1.0, %v1588
      %v1621 = vsel %vm1605, 1.0, %v1589
      %v1622 = vsel %vm1606, 1.0, %v1590
      %v1623 = vsel %vm1607, 1.0, %v1591
      %v1624 = vsel %vm1608, 1.0, %v1592
      %v1625 = vsel %vm1609, 1.0, %v1593
      %v1626 = vld [vmem:[#allocation4] sm:$0xff]
      %v1627 = vld [vmem:[#allocation4 + $0x8] sm:$0xff]
      %v1628 = vld [vmem:[#allocation4 + $0x10] sm:$0xff]
      %v1629 = vld [vmem:[#allocation4 + $0x18] sm:$0xff]
      %v1630 = vld [vmem:[#allocation4 + $0x20] sm:$0xff]
      %v1631 = vld [vmem:[#allocation4 + $0x28] sm:$0xff]
      %v1632 = vld [vmem:[#allocation4 + $0x30] sm:$0xff]
      %v1633 = vld [vmem:[#allocation4 + $0x38] sm:$0xff]
      %v1634 = vld [vmem:[#allocation4 + $0x40] sm:$0xff]
      %v1635 = vld [vmem:[#allocation4 + $0x48] sm:$0xff]
      %v1636 = vld [vmem:[#allocation4 + $0x50] sm:$0xff]
      %v1637 = vld [vmem:[#allocation4 + $0x58] sm:$0xff]
      %v1638 = vld [vmem:[#allocation4 + $0x60] sm:$0xff]
      %v1639 = vld [vmem:[#allocation4 + $0x68] sm:$0xff]
      %v1640 = vld [vmem:[#allocation4 + $0x70] sm:$0xff]
      %v1641 = vld [vmem:[#allocation4 + $0x78] sm:$0xff]
      %v1642 = vmul.f32 %v1578, %v1562
      %v1643 = vmul.f32 %v1579, %v1563
      %v1644 = vmul.f32 %v1580, %v1564
      %v1645 = vmul.f32 %v1581, %v1565
      %v1646 = vmul.f32 %v1582, %v1566
      %v1647 = vmul.f32 %v1583, %v1567
      %v1648 = vmul.f32 %v1584, %v1568
      %v1649 = vmul.f32 %v1585, %v1569
      %v1650 = vmul.f32 %v1586, %v1570
      %v1651 = vmul.f32 %v1587, %v1571
      %v1652 = vmul.f32 %v1588, %v1572
      %v1653 = vmul.f32 %v1589, %v1573
      %v1654 = vmul.f32 %v1590, %v1574
      %v1655 = vmul.f32 %v1591, %v1575
      %v1656 = vmul.f32 %v1592, %v1576
      %v1657 = vmul.f32 %v1593, %v1577
      %v1658 = vsub.f32 %v1626, %v1642
      %v1659 = vsub.f32 %v1627, %v1643
      %v1660 = vsub.f32 %v1628, %v1644
      %v1661 = vsub.f32 %v1629, %v1645
      %v1662 = vsub.f32 %v1630, %v1646
      %v1663 = vsub.f32 %v1631, %v1647
      %v1664 = vsub.f32 %v1632, %v1648
      %v1665 = vsub.f32 %v1633, %v1649
      %v1666 = vsub.f32 %v1634, %v1650
      %v1667 = vsub.f32 %v1635, %v1651
      %v1668 = vsub.f32 %v1636, %v1652
      %v1669 = vsub.f32 %v1637, %v1653
      %v1670 = vsub.f32 %v1638, %v1654
      %v1671 = vsub.f32 %v1639, %v1655
      %v1672 = vsub.f32 %v1640, %v1656
      %v1673 = vsub.f32 %v1641, %v1657
      %v1674 = vrcp.pop %v1610
      %v1675 = vmul.f32 %v1658, %v1674
      %v1676 = vrcp.pop %v1611
      %v1677 = vmul.f32 %v1659, %v1676
      %v1678 = vrcp.pop %v1612
      %v1679 = vmul.f32 %v1660, %v1678
      %v1680 = vrcp.pop %v1613
      %v1681 = vmul.f32 %v1661, %v1680
      %v1682 = vrcp.pop %v1614
      %v1683 = vmul.f32 %v1662, %v1682
      %v1684 = vrcp.pop %v1615
      %v1685 = vmul.f32 %v1663, %v1684
      %v1686 = vrcp.pop %v1616
      %v1687 = vmul.f32 %v1664, %v1686
      %v1688 = vrcp.pop %v1617
      %v1689 = vmul.f32 %v1665, %v1688
      %v1690 = vrcp.pop %v1618
      %v1691 = vmul.f32 %v1666, %v1690
      %v1692 = vrcp.pop %v1619
      %v1693 = vmul.f32 %v1667, %v1692
      %v1694 = vrcp.pop %v1620
      %v1695 = vmul.f32 %v1668, %v1694
      %v1696 = vrcp.pop %v1621
      %v1697 = vmul.f32 %v1669, %v1696
      %v1698 = vrcp.pop %v1622
      %v1699 = vmul.f32 %v1670, %v1698
      %v1700 = vrcp.pop %v1623
      %v1701 = vmul.f32 %v1671, %v1700
      %v1702 = vrcp.pop %v1624
      %v1703 = vmul.f32 %v1672, %v1702
      %v1704 = vrcp.pop %v1625
      %v1705 = vmul.f32 %v1673, %v1704
      %v1706 = vmul.f32 %v1675, -1.0
      %v1707 = vmul.f32 %v1677, -1.0
      %v1708 = vmul.f32 %v1679, -1.0
      %v1709 = vmul.f32 %v1681, -1.0
      %v1710 = vmul.f32 %v1683, -1.0
      %v1711 = vmul.f32 %v1685, -1.0
      %v1712 = vmul.f32 %v1687, -1.0
      %v1713 = vmul.f32 %v1689, -1.0
      %v1714 = vmul.f32 %v1691, -1.0
      %v1715 = vmul.f32 %v1693, -1.0
      %v1716 = vmul.f32 %v1695, -1.0
      %v1717 = vmul.f32 %v1697, -1.0
      %v1718 = vmul.f32 %v1699, -1.0
      %v1719 = vmul.f32 %v1701, -1.0
      %v1720 = vmul.f32 %v1703, -1.0
      %v1721 = vmul.f32 %v1705, -1.0
      %v1722 = vlaneseq
      %v1723 = vshrl.u32 %v1722, 7
      %v1724 = vadd.s32 %v1723, 8
      %v1725 = vadd.s32 %v1723, 16
      %v1726 = vadd.s32 %v1723, 24
      %v1727 = vadd.s32 %v1723, 32
      %v1728 = vadd.s32 %v1723, 40
      %v1729 = vadd.s32 %v1723, 48
      %v1730 = vadd.s32 %v1723, 56
      %v1731 = vadd.s32 %v1723, 64
      %v1732 = vadd.s32 %v1723, 72
      %v1733 = vadd.s32 %v1723, 80
      %v1734 = vadd.s32 %v1723, 88
      %v1735 = vadd.s32 %v1723, 96
      %v1736 = vadd.s32 %v1723, 104
      %v1737 = vadd.s32 %v1723, 112
      %v1738 = vadd.s32 %v1723, 120
      %v1739 = vstv %s490
      %v1740 = vadd.s32 %v1739, %v1723
      %v1741 = vadd.s32 %v1739, %v1724
      %v1742 = vadd.s32 %v1739, %v1725
      %v1743 = vadd.s32 %v1739, %v1726
      %v1744 = vadd.s32 %v1739, %v1727
      %v1745 = vadd.s32 %v1739, %v1728
      %v1746 = vadd.s32 %v1739, %v1729
      %v1747 = vadd.s32 %v1739, %v1730
      %v1748 = vadd.s32 %v1739, %v1731
      %v1749 = vadd.s32 %v1739, %v1732
      %v1750 = vadd.s32 %v1739, %v1733
      %v1751 = vadd.s32 %v1739, %v1734
      %v1752 = vadd.s32 %v1739, %v1735
      %v1753 = vadd.s32 %v1739, %v1736
      %v1754 = vadd.s32 %v1739, %v1737
      %v1755 = vadd.s32 %v1739, %v1738
      %vm1756 = vcmp.lt.s32.totalorder %v1740, 16
      %vm1757 = vcmp.lt.s32.totalorder %v1741, 16
      %vm1758 = vcmp.lt.s32.totalorder %v1742, 16
      %vm1759 = vcmp.lt.s32.totalorder %v1743, 16
      %vm1760 = vcmp.lt.s32.totalorder %v1744, 16
      %vm1761 = vcmp.lt.s32.totalorder %v1745, 16
      %vm1762 = vcmp.lt.s32.totalorder %v1746, 16
      %vm1763 = vcmp.lt.s32.totalorder %v1747, 16
      %vm1764 = vcmp.lt.s32.totalorder %v1748, 16
      %vm1765 = vcmp.lt.s32.totalorder %v1749, 16
      %vm1766 = vcmp.lt.s32.totalorder %v1750, 16
      %vm1767 = vcmp.lt.s32.totalorder %v1751, 16
      %vm1768 = vcmp.lt.s32.totalorder %v1752, 16
      %vm1769 = vcmp.lt.s32.totalorder %v1753, 16
      %vm1770 = vcmp.lt.s32.totalorder %v1754, 16
      %vm1771 = vcmp.lt.s32.totalorder %v1755, 16
      %v1772 = vsel %vm1756, %v1706, 0.0
      %v1773 = vsel %vm1757, %v1707, 0.0
      %v1774 = vsel %vm1758, %v1708, 0.0
      %v1775 = vsel %vm1759, %v1709, 0.0
      %v1776 = vsel %vm1760, %v1710, 0.0
      %v1777 = vsel %vm1761, %v1711, 0.0
      %v1778 = vsel %vm1762, %v1712, 0.0
      %v1779 = vsel %vm1763, %v1713, 0.0
      %v1780 = vsel %vm1764, %v1714, 0.0
      %v1781 = vsel %vm1765, %v1715, 0.0
      %v1782 = vsel %vm1766, %v1716, 0.0
      %v1783 = vsel %vm1767, %v1717, 0.0
      %v1784 = vsel %vm1768, %v1718, 0.0
      %v1785 = vsel %vm1769, %v1719, 0.0
      %v1786 = vsel %vm1770, %v1720, 0.0
      %v1787 = vsel %vm1771, %v1721, 0.0
      %1788 = vst.msk [vmem:[%s4] sm:$0xff] %vm1478, %v1772
      %1789 = vst.msk [vmem:[%s4 + $0x8] sm:$0xff] %vm1478, %v1773
      %1790 = vst.msk [vmem:[%s4 + $0x10] sm:$0xff] %vm1478, %v1774
      %1791 = vst.msk [vmem:[%s4 + $0x18] sm:$0xff] %vm1478, %v1775
      %1792 = vst.msk [vmem:[%s4 + $0x20] sm:$0xff] %vm1478, %v1776
      %1793 = vst.msk [vmem:[%s4 + $0x28] sm:$0xff] %vm1478, %v1777
      %1794 = vst.msk [vmem:[%s4 + $0x30] sm:$0xff] %vm1478, %v1778
      %1795 = vst.msk [vmem:[%s4 + $0x38] sm:$0xff] %vm1478, %v1779
      %1796 = vst.msk [vmem:[%s4 + $0x40] sm:$0xff] %vm1478, %v1780
      %1797 = vst.msk [vmem:[%s4 + $0x48] sm:$0xff] %vm1478, %v1781
      %1798 = vst.msk [vmem:[%s4 + $0x50] sm:$0xff] %vm1478, %v1782
      %1799 = vst.msk [vmem:[%s4 + $0x58] sm:$0xff] %vm1478, %v1783
      %1800 = vst.msk [vmem:[%s4 + $0x60] sm:$0xff] %vm1478, %v1784
      %1801 = vst.msk [vmem:[%s4 + $0x68] sm:$0xff] %vm1478, %v1785
      %1802 = vst.msk [vmem:[%s4 + $0x70] sm:$0xff] %vm1478, %v1786
      %1803 = vst.msk [vmem:[%s4 + $0x78] sm:$0xff] %vm1478, %v1787
    $region37: #{tpu_custom_call.1} parent=1 // pred_fallthru
      _
    // Predicated region
    $region38: #{tpu_custom_call.1} parent=1 // pred_check
      _
    $region39: #{tpu_custom_call.1} parent=1 // pred_check_branch
      %1805 = sbr.rel (0) target = $region41
    $region40: #{tpu_custom_call.1} parent=1 // pred_region
      _
    $region41: #{tpu_custom_call.1} parent=1 // pred_fallthru
      _
    // Predicated region
    $region42: #{tpu_custom_call.1} parent=1 // pred_check
      _
    $region43: #{tpu_custom_call.1} parent=1 // pred_check_branch
      %1807 = sbr.rel (0) target = $region45
    $region44: #{tpu_custom_call.1} parent=1 // pred_region
      _
    $region45: #{tpu_custom_call.1} parent=1 // pred_fallthru
      _
    %1808 = vsyncpa [#allocation7], 1

</llo_original>
